<compile_context>
chip_gen: v7x
topology: tpu7x:2x2x1
jax: 0.10.0
libtpu: 0.0.40
codegen_flags: <defaults>
</compile_context>

<pallas_src>
import math

import jax
import jax.numpy as jnp
from jax.experimental import pallas as pl
from jax.experimental.pallas import tpu as pltpu

N_KP = 68        # 136 = 68 * 2 coordinates
HEAT_D = 16      # spatial size of the heatmap (small, synthetic)
BATCH = 2
HIDDEN = 256
SQRT2 = math.sqrt(2.0)


def _fused_lrelu(v, b_row):
    # fused_leaky_relu(x, bias): leaky_relu(x + b, 0.2) * sqrt(2)   (all f32)
    v = v + b_row
    return jnp.where(v >= 0.0, v, 0.2 * v) * SQRT2


def simple_disc_kernel(hm_ref, tab_ref, w1_ref, w234_hbm, misc_ref, out_ref,
                       w234_vmem, dma_sem):
    # Kick off the bulk (layers 2-4) weight DMA immediately so it overlaps the
    # soft-argmax and layer-1 compute; we wait only right before layer 2.
    w234_copy = pltpu.make_async_copy(w234_hbm, w234_vmem, dma_sem)
    w234_copy.start()

    batch = hm_ref.shape[0]
    tab = tab_ref[...]                                     # [3, H*W] bf16

    # ---- heatmap_to_measure: soft-argmax barycenter on the MXU -------------
    # One [3, HW] @ [HW, K] bf16 matmul per sample yields rows
    # (mass, sum_y, sum_x) with keypoints in lanes; f32 accumulation.
    coord_rows = []
    for b in range(batch):
        res = jnp.dot(tab, hm_ref[b].T,
                      preferred_element_type=jnp.float32)  # [3, K] f32
        # Heatmaps are softmax-normalized, so mass ~ 1 (approx recip is safe;
        # add an eps here if unnormalized heatmaps are ever fed in).
        inv_mass = pl.reciprocal(res[0:1, :], approx=True)  # [1, K]
        coord_rows.append(jnp.concatenate(
            [res[1:2, :] * inv_mass, res[2:3, :] * inv_mass], axis=1))  # [1, 2K]
    x = jnp.concatenate(coord_rows, axis=0).astype(jnp.bfloat16)        # [B, 136]

    # ---- EqualLinear MLP (bf16 MXU matmuls, f32 accumulation / VPU math) ---
    # Layer 1: weights pre-scaled by 1/sqrt(in), transposed and de-interleaved
    # to [y-rows..., x-rows...] to match the coord concatenation above.
    h = jnp.dot(x, w1_ref[...], preferred_element_type=jnp.float32)     # [B, 256]
    h = _fused_lrelu(h, misc_ref[0:1, :])

    w234_copy.wait()                                       # layers 2-4 weights ready
    for i in range(3):
        h = jnp.dot(h.astype(jnp.bfloat16), w234_vmem[i],
                    preferred_element_type=jnp.float32)
        h = _fused_lrelu(h, misc_ref[i + 1:i + 2, :])

    # Layer 5 (out_features = 1): VPU lane reduction against the packed f32
    # w5 row (misc row 4) plus the scalar bias b5 (misc[5, 0]).
    out = jnp.sum(h * misc_ref[4:5, :], axis=-1, keepdims=True) + misc_ref[5:6, 0:1]
    out_ref[...] = out                                     # [B, 1] f32


def init_params(key):
    """Deterministic EqualLinear params: W ~ randn(out, in), b = 0, lr_mul = 1."""
    ks = jax.random.split(key, 5)
    dims = [(136, HIDDEN), (HIDDEN, HIDDEN), (HIDDEN, HIDDEN), (HIDDEN, HIDDEN),
            (HIDDEN, 1)]
    ws, bs = [], []
    for kk, (din, dout) in zip(ks, dims):
        ws.append(jax.random.normal(kk, (dout, din), dtype=jnp.float32))
        bs.append(jnp.zeros((dout,), dtype=jnp.float32))
    return ws, bs


def prepare_params(ws, bs):
    """One-time weight transform (NOT in the per-call path).

    Folds the EqualLinear 1/sqrt(in) scale, transposes to [in, out], casts the
    big matrices to bfloat16, de-interleaves layer-1 rows to [y..., x...],
    stacks layers 2-4 into one array, and packs biases + the f32 w5 row + b5
    into a single [6, 256] f32 array (operand consolidation).
    """
    def scaled_t(w):                         # [out, in] -> [in, out] * 1/sqrt(in)
        return (w * (1.0 / math.sqrt(w.shape[1]))).T

    w1 = scaled_t(ws[0])                                        # [136, 256] f32
    w1_de = jnp.concatenate([w1[0::2, :], w1[1::2, :]],
                            axis=0).astype(jnp.bfloat16)        # [136, 256] bf16
    w234 = jnp.stack([scaled_t(ws[1]), scaled_t(ws[2]), scaled_t(ws[3])],
                     axis=0).astype(jnp.bfloat16)               # [3, 256, 256] bf16
    w5_row = (ws[4] * (1.0 / math.sqrt(ws[4].shape[1]))).astype(jnp.float32)  # [1,256]

    misc = jnp.zeros((6, HIDDEN), dtype=jnp.float32)
    misc = misc.at[0].set(bs[0])
    misc = misc.at[1].set(bs[1])
    misc = misc.at[2].set(bs[2])
    misc = misc.at[3].set(bs[3])
    misc = misc.at[4].set(w5_row[0])
    misc = misc.at[5, 0].set(bs[4][0])
    return w1_de, w234, misc


def make_coord_table(h, w):
    """Packed [3, H*W] bf16 table: rows (ones, yi/(h-1), xi/(w-1))."""
    idx = jnp.arange(h * w, dtype=jnp.float32)
    yi = jnp.floor(idx / w)
    xi = idx - yi * w
    tab = jnp.stack([jnp.ones_like(idx), yi / (h - 1), xi / (w - 1)], axis=0)
    return tab.astype(jnp.bfloat16)


@jax.jit
def simple_disc_forward(hm, tab, params):
    """hm: [B, 68, H, W] float32  ->  [B, 1] float32."""
    b, k, h, w = hm.shape
    # bf16 heatmap halves the dominant non-weight DMA; under jit this cast
    # fuses with / is amortized by the producer of hm.
    hm_flat = hm.reshape(b, k, h * w).astype(jnp.bfloat16)
    w1_de, w234, misc = params
    vmem = pl.BlockSpec(memory_space=pltpu.MemorySpace.VMEM)
    return pl.pallas_call(
        simple_disc_kernel,
        out_shape=jax.ShapeDtypeStruct((b, 1), jnp.float32),
        in_specs=[vmem,                                   # hm   (bf16, auto-DMA)
                  vmem,                                   # table
                  vmem,                                   # w1 (de-interleaved)
                  pl.BlockSpec(memory_space=pl.ANY),      # stacked w2..w4 (manual DMA)
                  vmem],                                  # packed biases + w5 row
        out_specs=vmem,
        scratch_shapes=[
            pltpu.VMEM(w234.shape, jnp.bfloat16),         # VMEM home for w2..w4
            pltpu.SemaphoreType.DMA,
        ],
    )(hm_flat, tab, w1_de, w234, misc)


def reference_forward(hm, ws, bs, quantized=False):
    """Pure-JAX reference mirroring the PyTorch forward (f32 math).

    quantized=True rounds the heatmap, coordinate tables, layer-1..4 weights
    and pre-matmul activations to bfloat16 exactly like the kernel does,
    isolating kernel correctness from the deliberate bf16 quantization.
    """
    b, k, h, w = hm.shape
    hm2 = hm.reshape(b, k, h * w)
    idx = jnp.arange(h * w, dtype=jnp.float32)
    yi = jnp.floor(idx / w) / (h - 1)
    xi = (idx - jnp.floor(idx / w) * w) / (w - 1)
    if quantized:
        hm2 = hm2.astype(jnp.bfloat16).astype(jnp.float32)
        yi = yi.astype(jnp.bfloat16).astype(jnp.float32)
        xi = xi.astype(jnp.bfloat16).astype(jnp.float32)
    mass = hm2.sum(-1)
    cy = (hm2 * yi).sum(-1) / mass
    cx = (hm2 * xi).sum(-1) / mass
    coord = jnp.stack([cy, cx], axis=-1)        # [B, K, 2], (y, x)
    x = coord.reshape(b, 2 * k)                 # coord.view(-1, 136)
    acts = ['lrelu', 'lrelu', 'lrelu', 'lrelu', None]
    for wi, bi, act in zip(ws, bs, acts):
        w_eff = wi * (1.0 / math.sqrt(wi.shape[1]))
        if quantized and act == 'lrelu':        # kernel keeps layer 5 in f32
            w_eff = w_eff.astype(jnp.bfloat16).astype(jnp.float32)
            x = x.astype(jnp.bfloat16).astype(jnp.float32)
        x = x @ w_eff.T
        if act == 'lrelu':
            x = jnp.where(x + bi >= 0, x + bi, 0.2 * (x + bi)) * SQRT2
        else:
            x = x + bi
    return x


if __name__ == "__main__":
    key = jax.random.PRNGKey(0)
    k_hm, k_par = jax.random.split(key)

    # Synthetic heatmaps: positive, normalized over spatial dims (valid measures).
    logits = jax.random.normal(k_hm, (BATCH, N_KP, HEAT_D, HEAT_D), dtype=jnp.float32)
    hm = jax.nn.softmax(logits.reshape(BATCH, N_KP, -1), axis=-1)
    hm = hm.reshape(BATCH, N_KP, HEAT_D, HEAT_D)

    ws, bs = init_params(k_par)

    # One-time preprocessing (outside the per-call path).
    params = prepare_params(ws, bs)
    tab = make_coord_table(HEAT_D, HEAT_D)

    out = jax.block_until_ready(simple_disc_forward(hm, tab, params))
    assert out.shape == (BATCH, 1), out.shape

    # Tight check vs. a reference using identical bf16 rounding of heatmap,
    # tables, weights and activations (remaining delta: approx reciprocal +
    # accumulation order).
    ref_q = reference_forward(hm, ws, bs, quantized=True)
    assert jnp.allclose(out, ref_q, rtol=3e-2, atol=3e-2), (out, ref_q)

    # Loose check vs. the exact f32 PyTorch-equivalent forward (covers the
    # deliberate bf16 quantization).
    ref_f32 = reference_forward(hm, ws, bs, quantized=False)
    assert jnp.allclose(out, ref_f32, rtol=1.5e-1, atol=1.5e-1), (out, ref_f32)

    print("KERNEL_OK")
</pallas_src>

<mosaic_0001>
module attributes {stable_mosaic.version = 11 : i64} {
  func.func @simple_disc_kernel(%arg0: memref<2x68x256xbf16, #tpu.memory_space<vmem>>, %arg1: memref<3x256xbf16, #tpu.memory_space<vmem>>, %arg2: memref<136x256xbf16, #tpu.memory_space<vmem>>, %arg3: memref<3x256x256xbf16, #tpu.memory_space<any>>, %arg4: memref<6x256xf32, #tpu.memory_space<vmem>>, %arg5: memref<2x1xf32, #tpu.memory_space<vmem>>, %arg6: memref<3x256x256xbf16, #tpu.memory_space<vmem>>, %arg7: memref<!tpu.dma_semaphore, #tpu.memory_space<semaphore_mem>>) attributes {dimension_semantics = [], scalar_prefetch = 0 : i64, scratch_operands = 2 : i64, tpu.core_type = #tpu.core_type<tc>} {
    tpu.enqueue_dma source(%arg3 : memref<3x256x256xbf16, #tpu.memory_space<any>>) target(%arg6 : memref<3x256x256xbf16, #tpu.memory_space<vmem>>) target_semaphore(%arg7 : memref<!tpu.dma_semaphore, #tpu.memory_space<semaphore_mem>>)
    %c0 = arith.constant 0 : index
    %c0_0 = arith.constant 0 : index
    %0 = vector.load %arg1[%c0, %c0_0] : memref<3x256xbf16, #tpu.memory_space<vmem>>, vector<3x256xbf16>
    %c0_1 = arith.constant 0 : index
    %c0_2 = arith.constant 0 : index
    %c0_3 = arith.constant 0 : index
    %1 = vector.load %arg0[%c0_1, %c0_2, %c0_3] : memref<2x68x256xbf16, #tpu.memory_space<vmem>>, vector<1x68x256xbf16>
    %2 = vector.shape_cast %1 : vector<1x68x256xbf16> to vector<68x256xbf16>
    %3 = tpu.transpose %2, [1, 0] : vector<68x256xbf16> -> vector<256x68xbf16>
    %cst = arith.constant dense<0.000000e+00> : vector<3x68xf32>
    %4 = tpu.matmul %0, %3, %cst {dimension_numbers = #tpu.dot_dimension_numbers<[1], [0], [0], [1], [0, 0, 1, 1], [], []>} : vector<3x256xbf16>, vector<256x68xbf16>, vector<3x68xf32> -> vector<3x68xf32>
    %5 = vector.extract_strided_slice %4 {offsets = [0, 0], sizes = [1, 68], strides = [1, 1]} : vector<3x68xf32> to vector<1x68xf32>
    %6 = tpu.reciprocal %5 {approx = true} : vector<1x68xf32> -> vector<1x68xf32>
    %7 = vector.extract_strided_slice %4 {offsets = [1, 0], sizes = [1, 68], strides = [1, 1]} : vector<3x68xf32> to vector<1x68xf32>
    %8 = arith.mulf %7, %6 : vector<1x68xf32>
    %9 = vector.extract_strided_slice %4 {offsets = [2, 0], sizes = [1, 68], strides = [1, 1]} : vector<3x68xf32> to vector<1x68xf32>
    %10 = arith.mulf %9, %6 : vector<1x68xf32>
    %11 = tpu.concatenate %8, %10 in 1 : vector<1x68xf32>, vector<1x68xf32> -> vector<1x136xf32>
    %c1 = arith.constant 1 : index
    %c0_4 = arith.constant 0 : index
    %c0_5 = arith.constant 0 : index
    %12 = vector.load %arg0[%c1, %c0_4, %c0_5] : memref<2x68x256xbf16, #tpu.memory_space<vmem>>, vector<1x68x256xbf16>
    %13 = vector.shape_cast %12 : vector<1x68x256xbf16> to vector<68x256xbf16>
    %14 = tpu.transpose %13, [1, 0] : vector<68x256xbf16> -> vector<256x68xbf16>
    %cst_6 = arith.constant dense<0.000000e+00> : vector<3x68xf32>
    %15 = tpu.matmul %0, %14, %cst_6 {dimension_numbers = #tpu.dot_dimension_numbers<[1], [0], [0], [1], [0, 0, 1, 1], [], []>} : vector<3x256xbf16>, vector<256x68xbf16>, vector<3x68xf32> -> vector<3x68xf32>
    %16 = vector.extract_strided_slice %15 {offsets = [0, 0], sizes = [1, 68], strides = [1, 1]} : vector<3x68xf32> to vector<1x68xf32>
    %17 = tpu.reciprocal %16 {approx = true} : vector<1x68xf32> -> vector<1x68xf32>
    %18 = vector.extract_strided_slice %15 {offsets = [1, 0], sizes = [1, 68], strides = [1, 1]} : vector<3x68xf32> to vector<1x68xf32>
    %19 = arith.mulf %18, %17 : vector<1x68xf32>
    %20 = vector.extract_strided_slice %15 {offsets = [2, 0], sizes = [1, 68], strides = [1, 1]} : vector<3x68xf32> to vector<1x68xf32>
    %21 = arith.mulf %20, %17 : vector<1x68xf32>
    %22 = tpu.concatenate %19, %21 in 1 : vector<1x68xf32>, vector<1x68xf32> -> vector<1x136xf32>
    %23 = tpu.concatenate %11, %22 in 0 : vector<1x136xf32>, vector<1x136xf32> -> vector<2x136xf32>
    %24 = arith.truncf %23 : vector<2x136xf32> to vector<2x136xbf16>
    %c0_7 = arith.constant 0 : index
    %c0_8 = arith.constant 0 : index
    %25 = vector.load %arg2[%c0_7, %c0_8] : memref<136x256xbf16, #tpu.memory_space<vmem>>, vector<136x256xbf16>
    %cst_9 = arith.constant dense<0.000000e+00> : vector<2x256xf32>
    %26 = tpu.matmul %24, %25, %cst_9 {dimension_numbers = #tpu.dot_dimension_numbers<[1], [0], [0], [1], [0, 0, 1, 1], [], []>} : vector<2x136xbf16>, vector<136x256xbf16>, vector<2x256xf32> -> vector<2x256xf32>
    %c0_10 = arith.constant 0 : index
    %c0_11 = arith.constant 0 : index
    %27 = vector.load %arg4[%c0_10, %c0_11] : memref<6x256xf32, #tpu.memory_space<vmem>>, vector<1x256xf32>
    %28 = vector.broadcast %27 : vector<1x256xf32> to vector<2x256xf32>
    %29 = arith.addf %26, %28 : vector<2x256xf32>
    %cst_12 = arith.constant 0.000000e+00 : f32
    %30 = vector.broadcast %cst_12 : f32 to vector<2x256xf32>
    %31 = arith.cmpf oge, %29, %30 : vector<2x256xf32>
    %cst_13 = arith.constant 2.000000e-01 : f32
    %32 = vector.broadcast %cst_13 : f32 to vector<2x256xf32>
    %33 = arith.mulf %32, %29 : vector<2x256xf32>
    %34 = arith.select %31, %29, %33 : vector<2x256xi1>, vector<2x256xf32>
    %cst_14 = arith.constant 1.41421354 : f32
    %35 = vector.broadcast %cst_14 : f32 to vector<2x256xf32>
    %36 = arith.mulf %34, %35 : vector<2x256xf32>
    tpu.wait_dma2 semaphore(%arg7 : memref<!tpu.dma_semaphore, #tpu.memory_space<semaphore_mem>>) src(%arg3 : memref<3x256x256xbf16, #tpu.memory_space<any>>) dst(%arg6 : memref<3x256x256xbf16, #tpu.memory_space<vmem>>)
    %37 = arith.truncf %36 : vector<2x256xf32> to vector<2x256xbf16>
    %c0_15 = arith.constant 0 : index
    %c0_16 = arith.constant 0 : index
    %c0_17 = arith.constant 0 : index
    %38 = vector.load %arg6[%c0_15, %c0_16, %c0_17] : memref<3x256x256xbf16, #tpu.memory_space<vmem>>, vector<1x256x256xbf16>
    %39 = vector.shape_cast %38 : vector<1x256x256xbf16> to vector<256x256xbf16>
    %cst_18 = arith.constant dense<0.000000e+00> : vector<2x256xf32>
    %40 = tpu.matmul %37, %39, %cst_18 {dimension_numbers = #tpu.dot_dimension_numbers<[1], [0], [0], [1], [0, 0, 1, 1], [], []>} : vector<2x256xbf16>, vector<256x256xbf16>, vector<2x256xf32> -> vector<2x256xf32>
    %c1_19 = arith.constant 1 : index
    %c0_20 = arith.constant 0 : index
    %41 = vector.load %arg4[%c1_19, %c0_20] : memref<6x256xf32, #tpu.memory_space<vmem>>, vector<1x256xf32>
    %42 = vector.broadcast %41 : vector<1x256xf32> to vector<2x256xf32>
    %43 = arith.addf %40, %42 : vector<2x256xf32>
    %cst_21 = arith.constant 0.000000e+00 : f32
    %44 = vector.broadcast %cst_21 : f32 to vector<2x256xf32>
    %45 = arith.cmpf oge, %43, %44 : vector<2x256xf32>
    %cst_22 = arith.constant 2.000000e-01 : f32
    %46 = vector.broadcast %cst_22 : f32 to vector<2x256xf32>
    %47 = arith.mulf %46, %43 : vector<2x256xf32>
    %48 = arith.select %45, %43, %47 : vector<2x256xi1>, vector<2x256xf32>
    %cst_23 = arith.constant 1.41421354 : f32
    %49 = vector.broadcast %cst_23 : f32 to vector<2x256xf32>
    %50 = arith.mulf %48, %49 : vector<2x256xf32>
    %51 = arith.truncf %50 : vector<2x256xf32> to vector<2x256xbf16>
    %c1_24 = arith.constant 1 : index
    %c0_25 = arith.constant 0 : index
    %c0_26 = arith.constant 0 : index
    %52 = vector.load %arg6[%c1_24, %c0_25, %c0_26] : memref<3x256x256xbf16, #tpu.memory_space<vmem>>, vector<1x256x256xbf16>
    %53 = vector.shape_cast %52 : vector<1x256x256xbf16> to vector<256x256xbf16>
    %cst_27 = arith.constant dense<0.000000e+00> : vector<2x256xf32>
    %54 = tpu.matmul %51, %53, %cst_27 {dimension_numbers = #tpu.dot_dimension_numbers<[1], [0], [0], [1], [0, 0, 1, 1], [], []>} : vector<2x256xbf16>, vector<256x256xbf16>, vector<2x256xf32> -> vector<2x256xf32>
    %c2 = arith.constant 2 : index
    %c0_28 = arith.constant 0 : index
    %55 = vector.load %arg4[%c2, %c0_28] : memref<6x256xf32, #tpu.memory_space<vmem>>, vector<1x256xf32>
    %56 = vector.broadcast %55 : vector<1x256xf32> to vector<2x256xf32>
    %57 = arith.addf %54, %56 : vector<2x256xf32>
    %cst_29 = arith.constant 0.000000e+00 : f32
    %58 = vector.broadcast %cst_29 : f32 to vector<2x256xf32>
    %59 = arith.cmpf oge, %57, %58 : vector<2x256xf32>
    %cst_30 = arith.constant 2.000000e-01 : f32
    %60 = vector.broadcast %cst_30 : f32 to vector<2x256xf32>
    %61 = arith.mulf %60, %57 : vector<2x256xf32>
    %62 = arith.select %59, %57, %61 : vector<2x256xi1>, vector<2x256xf32>
    %cst_31 = arith.constant 1.41421354 : f32
    %63 = vector.broadcast %cst_31 : f32 to vector<2x256xf32>
    %64 = arith.mulf %62, %63 : vector<2x256xf32>
    %65 = arith.truncf %64 : vector<2x256xf32> to vector<2x256xbf16>
    %c2_32 = arith.constant 2 : index
    %c0_33 = arith.constant 0 : index
    %c0_34 = arith.constant 0 : index
    %66 = vector.load %arg6[%c2_32, %c0_33, %c0_34] : memref<3x256x256xbf16, #tpu.memory_space<vmem>>, vector<1x256x256xbf16>
    %67 = vector.shape_cast %66 : vector<1x256x256xbf16> to vector<256x256xbf16>
    %cst_35 = arith.constant dense<0.000000e+00> : vector<2x256xf32>
    %68 = tpu.matmul %65, %67, %cst_35 {dimension_numbers = #tpu.dot_dimension_numbers<[1], [0], [0], [1], [0, 0, 1, 1], [], []>} : vector<2x256xbf16>, vector<256x256xbf16>, vector<2x256xf32> -> vector<2x256xf32>
    %c3 = arith.constant 3 : index
    %c0_36 = arith.constant 0 : index
    %69 = vector.load %arg4[%c3, %c0_36] : memref<6x256xf32, #tpu.memory_space<vmem>>, vector<1x256xf32>
    %70 = vector.broadcast %69 : vector<1x256xf32> to vector<2x256xf32>
    %71 = arith.addf %68, %70 : vector<2x256xf32>
    %cst_37 = arith.constant 0.000000e+00 : f32
    %72 = vector.broadcast %cst_37 : f32 to vector<2x256xf32>
    %73 = arith.cmpf oge, %71, %72 : vector<2x256xf32>
    %cst_38 = arith.constant 2.000000e-01 : f32
    %74 = vector.broadcast %cst_38 : f32 to vector<2x256xf32>
    %75 = arith.mulf %74, %71 : vector<2x256xf32>
    %76 = arith.select %73, %71, %75 : vector<2x256xi1>, vector<2x256xf32>
    %cst_39 = arith.constant 1.41421354 : f32
    %77 = vector.broadcast %cst_39 : f32 to vector<2x256xf32>
    %78 = arith.mulf %76, %77 : vector<2x256xf32>
    %c4 = arith.constant 4 : index
    %c0_40 = arith.constant 0 : index
    %79 = vector.load %arg4[%c4, %c0_40] : memref<6x256xf32, #tpu.memory_space<vmem>>, vector<1x256xf32>
    %80 = vector.broadcast %79 : vector<1x256xf32> to vector<2x256xf32>
    %81 = arith.mulf %78, %80 : vector<2x256xf32>
    %cst_41 = arith.constant dense<0.000000e+00> : vector<2xf32>
    %82 = vector.multi_reduction <add>, %81, %cst_41 [1] : vector<2x256xf32> to vector<2xf32>
    %83 = vector.shape_cast %82 : vector<2xf32> to vector<2x1xf32>
    %c5 = arith.constant 5 : index
    %c0_42 = arith.constant 0 : index
    %84 = vector.load %arg4[%c5, %c0_42] : memref<6x256xf32, #tpu.memory_space<vmem>>, vector<1x1xf32>
    %85 = vector.broadcast %84 : vector<1x1xf32> to vector<2x1xf32>
    %86 = arith.addf %83, %85 : vector<2x1xf32>
    %c0_43 = arith.constant 0 : index
    %c0_44 = arith.constant 0 : index
    %87 = vector.load %arg5[%c0_43, %c0_44] : memref<2x1xf32, #tpu.memory_space<vmem>>, vector<2x1xf32>
    tpu.vector_store %arg5[%c0_43, %c0_44], %86 {strides = array<i32>} : memref<2x1xf32, #tpu.memory_space<vmem>>, vector<2x1xf32>,
    return
  }
}

</mosaic_0001>

<llo_original>
// kernel: simple_disc_forward.1
$region0: #{simple_disc_forward.1}
  #allocation0 [shape = 'u32[]', space=smem, size = 0x4, offset = 0x4, fixed_abs, tag = 'smem constant byte address 0x4 - core index']
  #allocation1 [shape = 'u32[144,128]{1,0:T(1,128)}', space=vmem, size = 0x12000, scoped, tag = 'internal scratch']
  #allocation2 [shape = 'bf16[3,256,256]{2,1,0:T(16,128)(2,1)}', space=vmem, size = 0x60000, scoped, tag = 'scratch operand']
  #allocation3 [shape = 's32[1]{0}', space=sflag, size = 0x4, scoped, tag = 'scratch operand']
  #allocation4 [shape = 's32[]', space=sflag, size = 0x4, offset = 0, fixed_abs, tag = 'sflag constant byte address 0x0 - dummy sync flag']
  %s0 = inlined_call_operand.vmem [shape: bf16[2,68,256], index: 0, kind: input, shape index: {}]
  %s1 = inlined_call_operand.vmem [shape: bf16[3,256], index: 1, kind: input, shape index: {}]
  %s2 = inlined_call_operand.vmem [shape: bf16[136,256], index: 2, kind: input, shape index: {}]
  %s3 = inlined_call_operand.vmem [shape: bf16[3,256,256], index: 3, kind: input, shape index: {}]
  %s4 = inlined_call_operand.vmem [shape: f32[6,256], index: 4, kind: input, shape index: {}]
  %s5 = inlined_call_operand.vmem [shape: f32[2,1], index: 5, kind: output, shape index: {}]
  %s6 = sld [smem:[#allocation0]]
  $region63: #{simple_disc_forward.1} parent=0
    _
  %s8 = ssub.s32 1, %s6
  %s9 = scalar_select 0, %s8, %s6
  // Predicated region
  $region2: #{simple_disc_forward.1} parent=0 // pred_check
    _
  $region3: #{simple_disc_forward.1} parent=0 // pred_check_branch
    %11 = sbr.rel (0) target = $region5
  $region4: #{simple_disc_forward.1} parent=0 // pred_region
    _
  $region5: #{simple_disc_forward.1} parent=0 // pred_fallthru
    _
  // Predicated region
  $region6: #{simple_disc_forward.1} parent=0 // pred_check
    _
  $region7: #{simple_disc_forward.1} parent=0 // pred_check_branch
    %13 = sbr.rel (0) target = $region9
  $region8: #{simple_disc_forward.1} parent=0 // pred_region
    _
  $region9: #{simple_disc_forward.1} parent=0 // pred_fallthru
    _
  // Predicated region
  $region10: #{simple_disc_forward.1} parent=0 // pred_check
    _
  $region11: #{simple_disc_forward.1} parent=0 // pred_check_branch
    %15 = sbr.rel (0) target = $region13
  $region12: #{simple_disc_forward.1} parent=0 // pred_region
    _
  $region13: #{simple_disc_forward.1} parent=0 // pred_fallthru
    _
  // Predicated region
  $region14: #{simple_disc_forward.1} parent=0 // pred_check
    _
  $region15: #{simple_disc_forward.1} parent=0 // pred_check_branch
    %17 = sbr.rel (0) target = $region17
  $region16: #{simple_disc_forward.1} parent=0 // pred_region
    _
  $region17: #{simple_disc_forward.1} parent=0 // pred_fallthru
    _
  %p20 = scmp.lt.u32.totalorder 4, 8
  %p21 = pneg %p20
  // Predicated region
  $region18: #{simple_disc_forward.1} parent=0 // pred_check
    _
  $region19: #{simple_disc_forward.1} parent=0 // pred_check_branch
    %23 = sbr.rel (%p20) target = $region21
  $region20: #{simple_disc_forward.1} parent=0 // pred_region
    %s420 = sand.u32 4, 7
    %p421 = scmp.eq.s32.totalorder %s420, 0
    %p422 = pneg %p421
    // Predicated region
    $region33: #{simple_disc_forward.1} parent=20 // pred_check
      _
    $region34: #{simple_disc_forward.1} parent=20 // pred_check_branch
      %424 = sbr.rel (%p421) target = $region36
    $region35: #{simple_disc_forward.1} parent=20 // pred_region
      %s425 = sand.u32 4, 7
      %s426 = ssub.s32 4, %s425
      %s427 = scalar_lea.vmem %s3, %s426
      %s428 = ssub.s32 4, %s425
      %s429 = scalar_lea.vmem [#allocation2], %s428
      loop: start=0, step=1, limit=1
      $region37: #{simple_disc_forward.1} parent=35 // loop_pre_header
        _
      $region38: #{simple_disc_forward.1} parent=35 // loop_header
        %s431 = sphi 0, %s435
        %p432 = scmp.ge.s32.totalorder %s431, 1
        %s436 = sphi %s3, %s3
        %s437 = sphi [#allocation2], [#allocation2]
      $region39: #{simple_disc_forward.1} parent=35 // loop_header_branch
        %434 = sbr.rel (%p432) target = $region43
      $region40: #{simple_disc_forward.1} parent=35 // loop_body
        _
      $region41: #{simple_disc_forward.1} parent=35 // loop_footer
        %s435 = sadd.s32 1, %s431
      $region42: #{simple_disc_forward.1} parent=35 // loop_footer_branch
        %430 = sbr.rel target = $region38
      $region43: #{simple_disc_forward.1} parent=35 // loop_exit
        _
      %s438 = sshllo.u32 0, %s425
      loop: start=0, step=1, limit=1
      $region44: #{simple_disc_forward.1} parent=35 // loop_pre_header
        _
      $region45: #{simple_disc_forward.1} parent=35 // loop_header
        %s440 = sphi 0, %s444
        %p441 = scmp.ge.s32.totalorder %s440, 1
        %s445 = sphi %s427, %s427
        %s446 = sphi %s429, %s429
      $region46: #{simple_disc_forward.1} parent=35 // loop_header_branch
        %443 = sbr.rel (%p441) target = $region50
      $region47: #{simple_disc_forward.1} parent=35 // loop_body
        %v447 = vld [vmem:[%s445] sm:%s438]
        %448 = vst [vmem:[%s446] sm:%s438] %v447
        %v449 = vld [vmem:[%s445 + $0x8] sm:%s438]
        %450 = vst [vmem:[%s446 + $0x4] sm:%s438] %v449
        %v451 = vld [vmem:[%s445 + $0x4] sm:%s438]
        %452 = vst [vmem:[%s446 + $0x8] sm:%s438] %v451
        %v453 = vld [vmem:[%s445 + $0xc] sm:%s438]
        %454 = vst [vmem:[%s446 + $0xc] sm:%s438] %v453
        %v455 = vld [vmem:[%s445 + $0x10] sm:%s438]
        %456 = vst [vmem:[%s446 + $0x10] sm:%s438] %v455
        %v457 = vld [vmem:[%s445 + $0x18] sm:%s438]
        %458 = vst [vmem:[%s446 + $0x14] sm:%s438] %v457
        %v459 = vld [vmem:[%s445 + $0x14] sm:%s438]
        %460 = vst [vmem:[%s446 + $0x18] sm:%s438] %v459
        %v461 = vld [vmem:[%s445 + $0x1c] sm:%s438]
        %462 = vst [vmem:[%s446 + $0x1c] sm:%s438] %v461
        %v463 = vld [vmem:[%s445 + $0x20] sm:%s438]
        %464 = vst [vmem:[%s446 + $0x20] sm:%s438] %v463
        %v465 = vld [vmem:[%s445 + $0x28] sm:%s438]
        %466 = vst [vmem:[%s446 + $0x24] sm:%s438] %v465
        %v467 = vld [vmem:[%s445 + $0x24] sm:%s438]
        %468 = vst [vmem:[%s446 + $0x28] sm:%s438] %v467
        %v469 = vld [vmem:[%s445 + $0x2c] sm:%s438]
        %470 = vst [vmem:[%s446 + $0x2c] sm:%s438] %v469
        %v471 = vld [vmem:[%s445 + $0x30] sm:%s438]
        %472 = vst [vmem:[%s446 + $0x30] sm:%s438] %v471
        %v473 = vld [vmem:[%s445 + $0x38] sm:%s438]
        %474 = vst [vmem:[%s446 + $0x34] sm:%s438] %v473
        %v475 = vld [vmem:[%s445 + $0x34] sm:%s438]
        %476 = vst [vmem:[%s446 + $0x38] sm:%s438] %v475
        %v477 = vld [vmem:[%s445 + $0x3c] sm:%s438]
        %478 = vst [vmem:[%s446 + $0x3c] sm:%s438] %v477
        %v479 = vld [vmem:[%s445 + $0x40] sm:%s438]
        %480 = vst [vmem:[%s446 + $0x40] sm:%s438] %v479
        %v481 = vld [vmem:[%s445 + $0x48] sm:%s438]
        %482 = vst [vmem:[%s446 + $0x44] sm:%s438] %v481
        %v483 = vld [vmem:[%s445 + $0x44] sm:%s438]
        %484 = vst [vmem:[%s446 + $0x48] sm:%s438] %v483
        %v485 = vld [vmem:[%s445 + $0x4c] sm:%s438]
        %486 = vst [vmem:[%s446 + $0x4c] sm:%s438] %v485
        %v487 = vld [vmem:[%s445 + $0x50] sm:%s438]
        %488 = vst [vmem:[%s446 + $0x50] sm:%s438] %v487
        %v489 = vld [vmem:[%s445 + $0x58] sm:%s438]
        %490 = vst [vmem:[%s446 + $0x54] sm:%s438] %v489
        %v491 = vld [vmem:[%s445 + $0x54] sm:%s438]
        %492 = vst [vmem:[%s446 + $0x58] sm:%s438] %v491
        %v493 = vld [vmem:[%s445 + $0x5c] sm:%s438]
        %494 = vst [vmem:[%s446 + $0x5c] sm:%s438] %v493
        %v495 = vld [vmem:[%s445 + $0x60] sm:%s438]
        %496 = vst [vmem:[%s446 + $0x60] sm:%s438] %v495
        %v497 = vld [vmem:[%s445 + $0x68] sm:%s438]
        %498 = vst [vmem:[%s446 + $0x64] sm:%s438] %v497
        %v499 = vld [vmem:[%s445 + $0x64] sm:%s438]
        %500 = vst [vmem:[%s446 + $0x68] sm:%s438] %v499
        %v501 = vld [vmem:[%s445 + $0x6c] sm:%s438]
        %502 = vst [vmem:[%s446 + $0x6c] sm:%s438] %v501
        %v503 = vld [vmem:[%s445 + $0x70] sm:%s438]
        %504 = vst [vmem:[%s446 + $0x70] sm:%s438] %v503
        %v505 = vld [vmem:[%s445 + $0x78] sm:%s438]
        %506 = vst [vmem:[%s446 + $0x74] sm:%s438] %v505
        %v507 = vld [vmem:[%s445 + $0x74] sm:%s438]
        %508 = vst [vmem:[%s446 + $0x78] sm:%s438] %v507
        %v509 = vld [vmem:[%s445 + $0x7c] sm:%s438]
        %510 = vst [vmem:[%s446 + $0x7c] sm:%s438] %v509
        %v511 = vld [vmem:[%s445 + $0x80] sm:%s438]
        %512 = vst [vmem:[%s446 + $0x80] sm:%s438] %v511
        %v513 = vld [vmem:[%s445 + $0x88] sm:%s438]
        %514 = vst [vmem:[%s446 + $0x84] sm:%s438] %v513
        %v515 = vld [vmem:[%s445 + $0x84] sm:%s438]
        %516 = vst [vmem:[%s446 + $0x88] sm:%s438] %v515
        %v517 = vld [vmem:[%s445 + $0x8c] sm:%s438]
        %518 = vst [vmem:[%s446 + $0x8c] sm:%s438] %v517
        %v519 = vld [vmem:[%s445 + $0x90] sm:%s438]
        %520 = vst [vmem:[%s446 + $0x90] sm:%s438] %v519
        %v521 = vld [vmem:[%s445 + $0x98] sm:%s438]
        %522 = vst [vmem:[%s446 + $0x94] sm:%s438] %v521
        %v523 = vld [vmem:[%s445 + $0x94] sm:%s438]
        %524 = vst [vmem:[%s446 + $0x98] sm:%s438] %v523
        %v525 = vld [vmem:[%s445 + $0x9c] sm:%s438]
        %526 = vst [vmem:[%s446 + $0x9c] sm:%s438] %v525
        %v527 = vld [vmem:[%s445 + $0xa0] sm:%s438]
        %528 = vst [vmem:[%s446 + $0xa0] sm:%s438] %v527
        %v529 = vld [vmem:[%s445 + $0xa8] sm:%s438]
        %530 = vst [vmem:[%s446 + $0xa4] sm:%s438] %v529
        %v531 = vld [vmem:[%s445 + $0xa4] sm:%s438]
        %532 = vst [vmem:[%s446 + $0xa8] sm:%s438] %v531
        %v533 = vld [vmem:[%s445 + $0xac] sm:%s438]
        %534 = vst [vmem:[%s446 + $0xac] sm:%s438] %v533
        %v535 = vld [vmem:[%s445 + $0xb0] sm:%s438]
        %536 = vst [vmem:[%s446 + $0xb0] sm:%s438] %v535
        %v537 = vld [vmem:[%s445 + $0xb8] sm:%s438]
        %538 = vst [vmem:[%s446 + $0xb4] sm:%s438] %v537
        %v539 = vld [vmem:[%s445 + $0xb4] sm:%s438]
        %540 = vst [vmem:[%s446 + $0xb8] sm:%s438] %v539
        %v541 = vld [vmem:[%s445 + $0xbc] sm:%s438]
        %542 = vst [vmem:[%s446 + $0xbc] sm:%s438] %v541
        %v543 = vld [vmem:[%s445 + $0xc0] sm:%s438]
        %544 = vst [vmem:[%s446 + $0xc0] sm:%s438] %v543
        %v545 = vld [vmem:[%s445 + $0xc8] sm:%s438]
        %546 = vst [vmem:[%s446 + $0xc4] sm:%s438] %v545
        %v547 = vld [vmem:[%s445 + $0xc4] sm:%s438]
        %548 = vst [vmem:[%s446 + $0xc8] sm:%s438] %v547
        %v549 = vld [vmem:[%s445 + $0xcc] sm:%s438]
        %550 = vst [vmem:[%s446 + $0xcc] sm:%s438] %v549
        %v551 = vld [vmem:[%s445 + $0xd0] sm:%s438]
        %552 = vst [vmem:[%s446 + $0xd0] sm:%s438] %v551
        %v553 = vld [vmem:[%s445 + $0xd8] sm:%s438]
        %554 = vst [vmem:[%s446 + $0xd4] sm:%s438] %v553
        %v555 = vld [vmem:[%s445 + $0xd4] sm:%s438]
        %556 = vst [vmem:[%s446 + $0xd8] sm:%s438] %v555
        %v557 = vld [vmem:[%s445 + $0xdc] sm:%s438]
        %558 = vst [vmem:[%s446 + $0xdc] sm:%s438] %v557
        %v559 = vld [vmem:[%s445 + $0xe0] sm:%s438]
        %560 = vst [vmem:[%s446 + $0xe0] sm:%s438] %v559
        %v561 = vld [vmem:[%s445 + $0xe8] sm:%s438]
        %562 = vst [vmem:[%s446 + $0xe4] sm:%s438] %v561
        %v563 = vld [vmem:[%s445 + $0xe4] sm:%s438]
        %564 = vst [vmem:[%s446 + $0xe8] sm:%s438] %v563
        %v565 = vld [vmem:[%s445 + $0xec] sm:%s438]
        %566 = vst [vmem:[%s446 + $0xec] sm:%s438] %v565
        %v567 = vld [vmem:[%s445 + $0xf0] sm:%s438]
        %568 = vst [vmem:[%s446 + $0xf0] sm:%s438] %v567
        %v569 = vld [vmem:[%s445 + $0xf8] sm:%s438]
        %570 = vst [vmem:[%s446 + $0xf4] sm:%s438] %v569
        %v571 = vld [vmem:[%s445 + $0xf4] sm:%s438]
        %572 = vst [vmem:[%s446 + $0xf8] sm:%s438] %v571
        %v573 = vld [vmem:[%s445 + $0xfc] sm:%s438]
        %574 = vst [vmem:[%s446 + $0xfc] sm:%s438] %v573
        %v575 = vld [vmem:[%s445 + $0x100] sm:%s438]
        %576 = vst [vmem:[%s446 + $0x100] sm:%s438] %v575
        %v577 = vld [vmem:[%s445 + $0x108] sm:%s438]
        %578 = vst [vmem:[%s446 + $0x104] sm:%s438] %v577
        %v579 = vld [vmem:[%s445 + $0x104] sm:%s438]
        %580 = vst [vmem:[%s446 + $0x108] sm:%s438] %v579
        %v581 = vld [vmem:[%s445 + $0x10c] sm:%s438]
        %582 = vst [vmem:[%s446 + $0x10c] sm:%s438] %v581
        %v583 = vld [vmem:[%s445 + $0x110] sm:%s438]
        %584 = vst [vmem:[%s446 + $0x110] sm:%s438] %v583
        %v585 = vld [vmem:[%s445 + $0x118] sm:%s438]
        %586 = vst [vmem:[%s446 + $0x114] sm:%s438] %v585
        %v587 = vld [vmem:[%s445 + $0x114] sm:%s438]
        %588 = vst [vmem:[%s446 + $0x118] sm:%s438] %v587
        %v589 = vld [vmem:[%s445 + $0x11c] sm:%s438]
        %590 = vst [vmem:[%s446 + $0x11c] sm:%s438] %v589
        %v591 = vld [vmem:[%s445 + $0x120] sm:%s438]
        %592 = vst [vmem:[%s446 + $0x120] sm:%s438] %v591
        %v593 = vld [vmem:[%s445 + $0x128] sm:%s438]
        %594 = vst [vmem:[%s446 + $0x124] sm:%s438] %v593
        %v595 = vld [vmem:[%s445 + $0x124] sm:%s438]
        %596 = vst [vmem:[%s446 + $0x128] sm:%s438] %v595
        %v597 = vld [vmem:[%s445 + $0x12c] sm:%s438]
        %598 = vst [vmem:[%s446 + $0x12c] sm:%s438] %v597
        %v599 = vld [vmem:[%s445 + $0x130] sm:%s438]
        %600 = vst [vmem:[%s446 + $0x130] sm:%s438] %v599
        %v601 = vld [vmem:[%s445 + $0x138] sm:%s438]
        %602 = vst [vmem:[%s446 + $0x134] sm:%s438] %v601
        %v603 = vld [vmem:[%s445 + $0x134] sm:%s438]
        %604 = vst [vmem:[%s446 + $0x138] sm:%s438] %v603
        %v605 = vld [vmem:[%s445 + $0x13c] sm:%s438]
        %606 = vst [vmem:[%s446 + $0x13c] sm:%s438] %v605
        %v607 = vld [vmem:[%s445 + $0x140] sm:%s438]
        %608 = vst [vmem:[%s446 + $0x140] sm:%s438] %v607
        %v609 = vld [vmem:[%s445 + $0x148] sm:%s438]
        %610 = vst [vmem:[%s446 + $0x144] sm:%s438] %v609
        %v611 = vld [vmem:[%s445 + $0x144] sm:%s438]
        %612 = vst [vmem:[%s446 + $0x148] sm:%s438] %v611
        %v613 = vld [vmem:[%s445 + $0x14c] sm:%s438]
        %614 = vst [vmem:[%s446 + $0x14c] sm:%s438] %v613
        %v615 = vld [vmem:[%s445 + $0x150] sm:%s438]
        %616 = vst [vmem:[%s446 + $0x150] sm:%s438] %v615
        %v617 = vld [vmem:[%s445 + $0x158] sm:%s438]
        %618 = vst [vmem:[%s446 + $0x154] sm:%s438] %v617
        %v619 = vld [vmem:[%s445 + $0x154] sm:%s438]
        %620 = vst [vmem:[%s446 + $0x158] sm:%s438] %v619
        %v621 = vld [vmem:[%s445 + $0x15c] sm:%s438]
        %622 = vst [vmem:[%s446 + $0x15c] sm:%s438] %v621
        %v623 = vld [vmem:[%s445 + $0x160] sm:%s438]
        %624 = vst [vmem:[%s446 + $0x160] sm:%s438] %v623
        %v625 = vld [vmem:[%s445 + $0x168] sm:%s438]
        %626 = vst [vmem:[%s446 + $0x164] sm:%s438] %v625
        %v627 = vld [vmem:[%s445 + $0x164] sm:%s438]
        %628 = vst [vmem:[%s446 + $0x168] sm:%s438] %v627
        %v629 = vld [vmem:[%s445 + $0x16c] sm:%s438]
        %630 = vst [vmem:[%s446 + $0x16c] sm:%s438] %v629
        %v631 = vld [vmem:[%s445 + $0x170] sm:%s438]
        %632 = vst [vmem:[%s446 + $0x170] sm:%s438] %v631
        %v633 = vld [vmem:[%s445 + $0x178] sm:%s438]
        %634 = vst [vmem:[%s446 + $0x174] sm:%s438] %v633
        %v635 = vld [vmem:[%s445 + $0x174] sm:%s438]
        %636 = vst [vmem:[%s446 + $0x178] sm:%s438] %v635
        %v637 = vld [vmem:[%s445 + $0x17c] sm:%s438]
        %638 = vst [vmem:[%s446 + $0x17c] sm:%s438] %v637
        %v639 = vld [vmem:[%s445 + $0x180] sm:%s438]
        %640 = vst [vmem:[%s446 + $0x180] sm:%s438] %v639
        %v641 = vld [vmem:[%s445 + $0x188] sm:%s438]
        %642 = vst [vmem:[%s446 + $0x184] sm:%s438] %v641
        %v643 = vld [vmem:[%s445 + $0x184] sm:%s438]
        %644 = vst [vmem:[%s446 + $0x188] sm:%s438] %v643
        %v645 = vld [vmem:[%s445 + $0x18c] sm:%s438]
        %646 = vst [vmem:[%s446 + $0x18c] sm:%s438] %v645
        %v647 = vld [vmem:[%s445 + $0x190] sm:%s438]
        %648 = vst [vmem:[%s446 + $0x190] sm:%s438] %v647
        %v649 = vld [vmem:[%s445 + $0x198] sm:%s438]
        %650 = vst [vmem:[%s446 + $0x194] sm:%s438] %v649
        %v651 = vld [vmem:[%s445 + $0x194] sm:%s438]
        %652 = vst [vmem:[%s446 + $0x198] sm:%s438] %v651
        %v653 = vld [vmem:[%s445 + $0x19c] sm:%s438]
        %654 = vst [vmem:[%s446 + $0x19c] sm:%s438] %v653
        %v655 = vld [vmem:[%s445 + $0x1a0] sm:%s438]
        %656 = vst [vmem:[%s446 + $0x1a0] sm:%s438] %v655
        %v657 = vld [vmem:[%s445 + $0x1a8] sm:%s438]
        %658 = vst [vmem:[%s446 + $0x1a4] sm:%s438] %v657
        %v659 = vld [vmem:[%s445 + $0x1a4] sm:%s438]
        %660 = vst [vmem:[%s446 + $0x1a8] sm:%s438] %v659
        %v661 = vld [vmem:[%s445 + $0x1ac] sm:%s438]
        %662 = vst [vmem:[%s446 + $0x1ac] sm:%s438] %v661
        %v663 = vld [vmem:[%s445 + $0x1b0] sm:%s438]
        %664 = vst [vmem:[%s446 + $0x1b0] sm:%s438] %v663
        %v665 = vld [vmem:[%s445 + $0x1b8] sm:%s438]
        %666 = vst [vmem:[%s446 + $0x1b4] sm:%s438] %v665
        %v667 = vld [vmem:[%s445 + $0x1b4] sm:%s438]
        %668 = vst [vmem:[%s446 + $0x1b8] sm:%s438] %v667
        %v669 = vld [vmem:[%s445 + $0x1bc] sm:%s438]
        %670 = vst [vmem:[%s446 + $0x1bc] sm:%s438] %v669
        %v671 = vld [vmem:[%s445 + $0x1c0] sm:%s438]
        %672 = vst [vmem:[%s446 + $0x1c0] sm:%s438] %v671
        %v673 = vld [vmem:[%s445 + $0x1c8] sm:%s438]
        %674 = vst [vmem:[%s446 + $0x1c4] sm:%s438] %v673
        %v675 = vld [vmem:[%s445 + $0x1c4] sm:%s438]
        %676 = vst [vmem:[%s446 + $0x1c8] sm:%s438] %v675
        %v677 = vld [vmem:[%s445 + $0x1cc] sm:%s438]
        %678 = vst [vmem:[%s446 + $0x1cc] sm:%s438] %v677
        %v679 = vld [vmem:[%s445 + $0x1d0] sm:%s438]
        %680 = vst [vmem:[%s446 + $0x1d0] sm:%s438] %v679
        %v681 = vld [vmem:[%s445 + $0x1d8] sm:%s438]
        %682 = vst [vmem:[%s446 + $0x1d4] sm:%s438] %v681
        %v683 = vld [vmem:[%s445 + $0x1d4] sm:%s438]
        %684 = vst [vmem:[%s446 + $0x1d8] sm:%s438] %v683
        %v685 = vld [vmem:[%s445 + $0x1dc] sm:%s438]
        %686 = vst [vmem:[%s446 + $0x1dc] sm:%s438] %v685
        %v687 = vld [vmem:[%s445 + $0x1e0] sm:%s438]
        %688 = vst [vmem:[%s446 + $0x1e0] sm:%s438] %v687
        %v689 = vld [vmem:[%s445 + $0x1e8] sm:%s438]
        %690 = vst [vmem:[%s446 + $0x1e4] sm:%s438] %v689
        %v691 = vld [vmem:[%s445 + $0x1e4] sm:%s438]
        %692 = vst [vmem:[%s446 + $0x1e8] sm:%s438] %v691
        %v693 = vld [vmem:[%s445 + $0x1ec] sm:%s438]
        %694 = vst [vmem:[%s446 + $0x1ec] sm:%s438] %v693
        %v695 = vld [vmem:[%s445 + $0x1f0] sm:%s438]
        %696 = vst [vmem:[%s446 + $0x1f0] sm:%s438] %v695
        %v697 = vld [vmem:[%s445 + $0x1f8] sm:%s438]
        %698 = vst [vmem:[%s446 + $0x1f4] sm:%s438] %v697
        %v699 = vld [vmem:[%s445 + $0x1f4] sm:%s438]
        %700 = vst [vmem:[%s446 + $0x1f8] sm:%s438] %v699
        %v701 = vld [vmem:[%s445 + $0x1fc] sm:%s438]
        %702 = vst [vmem:[%s446 + $0x1fc] sm:%s438] %v701
        %v703 = vld [vmem:[%s445 + $0x200] sm:%s438]
        %704 = vst [vmem:[%s446 + $0x200] sm:%s438] %v703
        %v705 = vld [vmem:[%s445 + $0x208] sm:%s438]
        %706 = vst [vmem:[%s446 + $0x204] sm:%s438] %v705
        %v707 = vld [vmem:[%s445 + $0x204] sm:%s438]
        %708 = vst [vmem:[%s446 + $0x208] sm:%s438] %v707
        %v709 = vld [vmem:[%s445 + $0x20c] sm:%s438]
        %710 = vst [vmem:[%s446 + $0x20c] sm:%s438] %v709
        %v711 = vld [vmem:[%s445 + $0x210] sm:%s438]
        %712 = vst [vmem:[%s446 + $0x210] sm:%s438] %v711
        %v713 = vld [vmem:[%s445 + $0x218] sm:%s438]
        %714 = vst [vmem:[%s446 + $0x214] sm:%s438] %v713
        %v715 = vld [vmem:[%s445 + $0x214] sm:%s438]
        %716 = vst [vmem:[%s446 + $0x218] sm:%s438] %v715
        %v717 = vld [vmem:[%s445 + $0x21c] sm:%s438]
        %718 = vst [vmem:[%s446 + $0x21c] sm:%s438] %v717
        %v719 = vld [vmem:[%s445 + $0x220] sm:%s438]
        %720 = vst [vmem:[%s446 + $0x220] sm:%s438] %v719
        %v721 = vld [vmem:[%s445 + $0x228] sm:%s438]
        %722 = vst [vmem:[%s446 + $0x224] sm:%s438] %v721
        %v723 = vld [vmem:[%s445 + $0x224] sm:%s438]
        %724 = vst [vmem:[%s446 + $0x228] sm:%s438] %v723
        %v725 = vld [vmem:[%s445 + $0x22c] sm:%s438]
        %726 = vst [vmem:[%s446 + $0x22c] sm:%s438] %v725
        %v727 = vld [vmem:[%s445 + $0x230] sm:%s438]
        %728 = vst [vmem:[%s446 + $0x230] sm:%s438] %v727
        %v729 = vld [vmem:[%s445 + $0x238] sm:%s438]
        %730 = vst [vmem:[%s446 + $0x234] sm:%s438] %v729
        %v731 = vld [vmem:[%s445 + $0x234] sm:%s438]
        %732 = vst [vmem:[%s446 + $0x238] sm:%s438] %v731
        %v733 = vld [vmem:[%s445 + $0x23c] sm:%s438]
        %734 = vst [vmem:[%s446 + $0x23c] sm:%s438] %v733
        %v735 = vld [vmem:[%s445 + $0x240] sm:%s438]
        %736 = vst [vmem:[%s446 + $0x240] sm:%s438] %v735
        %v737 = vld [vmem:[%s445 + $0x248] sm:%s438]
        %738 = vst [vmem:[%s446 + $0x244] sm:%s438] %v737
        %v739 = vld [vmem:[%s445 + $0x244] sm:%s438]
        %740 = vst [vmem:[%s446 + $0x248] sm:%s438] %v739
        %v741 = vld [vmem:[%s445 + $0x24c] sm:%s438]
        %742 = vst [vmem:[%s446 + $0x24c] sm:%s438] %v741
        %v743 = vld [vmem:[%s445 + $0x250] sm:%s438]
        %744 = vst [vmem:[%s446 + $0x250] sm:%s438] %v743
        %v745 = vld [vmem:[%s445 + $0x258] sm:%s438]
        %746 = vst [vmem:[%s446 + $0x254] sm:%s438] %v745
        %v747 = vld [vmem:[%s445 + $0x254] sm:%s438]
        %748 = vst [vmem:[%s446 + $0x258] sm:%s438] %v747
        %v749 = vld [vmem:[%s445 + $0x25c] sm:%s438]
        %750 = vst [vmem:[%s446 + $0x25c] sm:%s438] %v749
        %v751 = vld [vmem:[%s445 + $0x260] sm:%s438]
        %752 = vst [vmem:[%s446 + $0x260] sm:%s438] %v751
        %v753 = vld [vmem:[%s445 + $0x268] sm:%s438]
        %754 = vst [vmem:[%s446 + $0x264] sm:%s438] %v753
        %v755 = vld [vmem:[%s445 + $0x264] sm:%s438]
        %756 = vst [vmem:[%s446 + $0x268] sm:%s438] %v755
        %v757 = vld [vmem:[%s445 + $0x26c] sm:%s438]
        %758 = vst [vmem:[%s446 + $0x26c] sm:%s438] %v757
        %v759 = vld [vmem:[%s445 + $0x270] sm:%s438]
        %760 = vst [vmem:[%s446 + $0x270] sm:%s438] %v759
        %v761 = vld [vmem:[%s445 + $0x278] sm:%s438]
        %762 = vst [vmem:[%s446 + $0x274] sm:%s438] %v761
        %v763 = vld [vmem:[%s445 + $0x274] sm:%s438]
        %764 = vst [vmem:[%s446 + $0x278] sm:%s438] %v763
        %v765 = vld [vmem:[%s445 + $0x27c] sm:%s438]
        %766 = vst [vmem:[%s446 + $0x27c] sm:%s438] %v765
        %v767 = vld [vmem:[%s445 + $0x280] sm:%s438]
        %768 = vst [vmem:[%s446 + $0x280] sm:%s438] %v767
        %v769 = vld [vmem:[%s445 + $0x288] sm:%s438]
        %770 = vst [vmem:[%s446 + $0x284] sm:%s438] %v769
        %v771 = vld [vmem:[%s445 + $0x284] sm:%s438]
        %772 = vst [vmem:[%s446 + $0x288] sm:%s438] %v771
        %v773 = vld [vmem:[%s445 + $0x28c] sm:%s438]
        %774 = vst [vmem:[%s446 + $0x28c] sm:%s438] %v773
        %v775 = vld [vmem:[%s445 + $0x290] sm:%s438]
        %776 = vst [vmem:[%s446 + $0x290] sm:%s438] %v775
        %v777 = vld [vmem:[%s445 + $0x298] sm:%s438]
        %778 = vst [vmem:[%s446 + $0x294] sm:%s438] %v777
        %v779 = vld [vmem:[%s445 + $0x294] sm:%s438]
        %780 = vst [vmem:[%s446 + $0x298] sm:%s438] %v779
        %v781 = vld [vmem:[%s445 + $0x29c] sm:%s438]
        %782 = vst [vmem:[%s446 + $0x29c] sm:%s438] %v781
        %v783 = vld [vmem:[%s445 + $0x2a0] sm:%s438]
        %784 = vst [vmem:[%s446 + $0x2a0] sm:%s438] %v783
        %v785 = vld [vmem:[%s445 + $0x2a8] sm:%s438]
        %786 = vst [vmem:[%s446 + $0x2a4] sm:%s438] %v785
        %v787 = vld [vmem:[%s445 + $0x2a4] sm:%s438]
        %788 = vst [vmem:[%s446 + $0x2a8] sm:%s438] %v787
        %v789 = vld [vmem:[%s445 + $0x2ac] sm:%s438]
        %790 = vst [vmem:[%s446 + $0x2ac] sm:%s438] %v789
        %v791 = vld [vmem:[%s445 + $0x2b0] sm:%s438]
        %792 = vst [vmem:[%s446 + $0x2b0] sm:%s438] %v791
        %v793 = vld [vmem:[%s445 + $0x2b8] sm:%s438]
        %794 = vst [vmem:[%s446 + $0x2b4] sm:%s438] %v793
        %v795 = vld [vmem:[%s445 + $0x2b4] sm:%s438]
        %796 = vst [vmem:[%s446 + $0x2b8] sm:%s438] %v795
        %v797 = vld [vmem:[%s445 + $0x2bc] sm:%s438]
        %798 = vst [vmem:[%s446 + $0x2bc] sm:%s438] %v797
        %v799 = vld [vmem:[%s445 + $0x2c0] sm:%s438]
        %800 = vst [vmem:[%s446 + $0x2c0] sm:%s438] %v799
        %v801 = vld [vmem:[%s445 + $0x2c8] sm:%s438]
        %802 = vst [vmem:[%s446 + $0x2c4] sm:%s438] %v801
        %v803 = vld [vmem:[%s445 + $0x2c4] sm:%s438]
        %804 = vst [vmem:[%s446 + $0x2c8] sm:%s438] %v803
        %v805 = vld [vmem:[%s445 + $0x2cc] sm:%s438]
        %806 = vst [vmem:[%s446 + $0x2cc] sm:%s438] %v805
        %v807 = vld [vmem:[%s445 + $0x2d0] sm:%s438]
        %808 = vst [vmem:[%s446 + $0x2d0] sm:%s438] %v807
        %v809 = vld [vmem:[%s445 + $0x2d8] sm:%s438]
        %810 = vst [vmem:[%s446 + $0x2d4] sm:%s438] %v809
        %v811 = vld [vmem:[%s445 + $0x2d4] sm:%s438]
        %812 = vst [vmem:[%s446 + $0x2d8] sm:%s438] %v811
        %v813 = vld [vmem:[%s445 + $0x2dc] sm:%s438]
        %814 = vst [vmem:[%s446 + $0x2dc] sm:%s438] %v813
        %v815 = vld [vmem:[%s445 + $0x2e0] sm:%s438]
        %816 = vst [vmem:[%s446 + $0x2e0] sm:%s438] %v815
        %v817 = vld [vmem:[%s445 + $0x2e8] sm:%s438]
        %818 = vst [vmem:[%s446 + $0x2e4] sm:%s438] %v817
        %v819 = vld [vmem:[%s445 + $0x2e4] sm:%s438]
        %820 = vst [vmem:[%s446 + $0x2e8] sm:%s438] %v819
        %v821 = vld [vmem:[%s445 + $0x2ec] sm:%s438]
        %822 = vst [vmem:[%s446 + $0x2ec] sm:%s438] %v821
        %v823 = vld [vmem:[%s445 + $0x2f0] sm:%s438]
        %824 = vst [vmem:[%s446 + $0x2f0] sm:%s438] %v823
        %v825 = vld [vmem:[%s445 + $0x2f8] sm:%s438]
        %826 = vst [vmem:[%s446 + $0x2f4] sm:%s438] %v825
        %v827 = vld [vmem:[%s445 + $0x2f4] sm:%s438]
        %828 = vst [vmem:[%s446 + $0x2f8] sm:%s438] %v827
        %v829 = vld [vmem:[%s445 + $0x2fc] sm:%s438]
        %830 = vst [vmem:[%s446 + $0x2fc] sm:%s438] %v829
      $region48: #{simple_disc_forward.1} parent=35 // loop_footer
        %s444 = sadd.s32 1, %s440
      $region49: #{simple_disc_forward.1} parent=35 // loop_footer_branch
        %439 = sbr.rel target = $region45
      $region50: #{simple_disc_forward.1} parent=35 // loop_exit
        _
    $region36: #{simple_disc_forward.1} parent=20 // pred_fallthru
      _
  $region21: #{simple_disc_forward.1} parent=0 // pred_fallthru
    _
  // Predicated region
  $region22: #{simple_disc_forward.1} parent=0 // pred_check
    %p24 = pneg %p20
  $region23: #{simple_disc_forward.1} parent=0 // pred_check_branch
    %26 = sbr.rel (%p24) target = $region25
  $region24: #{simple_disc_forward.1} parent=0 // pred_region
    %s27 = sshllo.u32 0, 4
    loop: start=0, step=1, limit=1
    $region26: #{simple_disc_forward.1} parent=24 // loop_pre_header
      _
    $region27: #{simple_disc_forward.1} parent=24 // loop_header
      %s29 = sphi 0, %s33
      %p30 = scmp.ge.s32.totalorder %s29, 1
      %s34 = sphi %s3, %s3
      %s35 = sphi [#allocation2], [#allocation2]
    $region28: #{simple_disc_forward.1} parent=24 // loop_header_branch
      %32 = sbr.rel (%p30) target = $region32
    $region29: #{simple_disc_forward.1} parent=24 // loop_body
      %v36 = vld [vmem:[%s34] sm:%s27]
      %37 = vst [vmem:[%s35] sm:%s27] %v36
      %v38 = vld [vmem:[%s34 + $0x8] sm:%s27]
      %39 = vst [vmem:[%s35 + $0x4] sm:%s27] %v38
      %v40 = vld [vmem:[%s34 + $0x4] sm:%s27]
      %41 = vst [vmem:[%s35 + $0x8] sm:%s27] %v40
      %v42 = vld [vmem:[%s34 + $0xc] sm:%s27]
      %43 = vst [vmem:[%s35 + $0xc] sm:%s27] %v42
      %v44 = vld [vmem:[%s34 + $0x10] sm:%s27]
      %45 = vst [vmem:[%s35 + $0x10] sm:%s27] %v44
      %v46 = vld [vmem:[%s34 + $0x18] sm:%s27]
      %47 = vst [vmem:[%s35 + $0x14] sm:%s27] %v46
      %v48 = vld [vmem:[%s34 + $0x14] sm:%s27]
      %49 = vst [vmem:[%s35 + $0x18] sm:%s27] %v48
      %v50 = vld [vmem:[%s34 + $0x1c] sm:%s27]
      %51 = vst [vmem:[%s35 + $0x1c] sm:%s27] %v50
      %v52 = vld [vmem:[%s34 + $0x20] sm:%s27]
      %53 = vst [vmem:[%s35 + $0x20] sm:%s27] %v52
      %v54 = vld [vmem:[%s34 + $0x28] sm:%s27]
      %55 = vst [vmem:[%s35 + $0x24] sm:%s27] %v54
      %v56 = vld [vmem:[%s34 + $0x24] sm:%s27]
      %57 = vst [vmem:[%s35 + $0x28] sm:%s27] %v56
      %v58 = vld [vmem:[%s34 + $0x2c] sm:%s27]
      %59 = vst [vmem:[%s35 + $0x2c] sm:%s27] %v58
      %v60 = vld [vmem:[%s34 + $0x30] sm:%s27]
      %61 = vst [vmem:[%s35 + $0x30] sm:%s27] %v60
      %v62 = vld [vmem:[%s34 + $0x38] sm:%s27]
      %63 = vst [vmem:[%s35 + $0x34] sm:%s27] %v62
      %v64 = vld [vmem:[%s34 + $0x34] sm:%s27]
      %65 = vst [vmem:[%s35 + $0x38] sm:%s27] %v64
      %v66 = vld [vmem:[%s34 + $0x3c] sm:%s27]
      %67 = vst [vmem:[%s35 + $0x3c] sm:%s27] %v66
      %v68 = vld [vmem:[%s34 + $0x40] sm:%s27]
      %69 = vst [vmem:[%s35 + $0x40] sm:%s27] %v68
      %v70 = vld [vmem:[%s34 + $0x48] sm:%s27]
      %71 = vst [vmem:[%s35 + $0x44] sm:%s27] %v70
      %v72 = vld [vmem:[%s34 + $0x44] sm:%s27]
      %73 = vst [vmem:[%s35 + $0x48] sm:%s27] %v72
      %v74 = vld [vmem:[%s34 + $0x4c] sm:%s27]
      %75 = vst [vmem:[%s35 + $0x4c] sm:%s27] %v74
      %v76 = vld [vmem:[%s34 + $0x50] sm:%s27]
      %77 = vst [vmem:[%s35 + $0x50] sm:%s27] %v76
      %v78 = vld [vmem:[%s34 + $0x58] sm:%s27]
      %79 = vst [vmem:[%s35 + $0x54] sm:%s27] %v78
      %v80 = vld [vmem:[%s34 + $0x54] sm:%s27]
      %81 = vst [vmem:[%s35 + $0x58] sm:%s27] %v80
      %v82 = vld [vmem:[%s34 + $0x5c] sm:%s27]
      %83 = vst [vmem:[%s35 + $0x5c] sm:%s27] %v82
      %v84 = vld [vmem:[%s34 + $0x60] sm:%s27]
      %85 = vst [vmem:[%s35 + $0x60] sm:%s27] %v84
      %v86 = vld [vmem:[%s34 + $0x68] sm:%s27]
      %87 = vst [vmem:[%s35 + $0x64] sm:%s27] %v86
      %v88 = vld [vmem:[%s34 + $0x64] sm:%s27]
      %89 = vst [vmem:[%s35 + $0x68] sm:%s27] %v88
      %v90 = vld [vmem:[%s34 + $0x6c] sm:%s27]
      %91 = vst [vmem:[%s35 + $0x6c] sm:%s27] %v90
      %v92 = vld [vmem:[%s34 + $0x70] sm:%s27]
      %93 = vst [vmem:[%s35 + $0x70] sm:%s27] %v92
      %v94 = vld [vmem:[%s34 + $0x78] sm:%s27]
      %95 = vst [vmem:[%s35 + $0x74] sm:%s27] %v94
      %v96 = vld [vmem:[%s34 + $0x74] sm:%s27]
      %97 = vst [vmem:[%s35 + $0x78] sm:%s27] %v96
      %v98 = vld [vmem:[%s34 + $0x7c] sm:%s27]
      %99 = vst [vmem:[%s35 + $0x7c] sm:%s27] %v98
      %v100 = vld [vmem:[%s34 + $0x80] sm:%s27]
      %101 = vst [vmem:[%s35 + $0x80] sm:%s27] %v100
      %v102 = vld [vmem:[%s34 + $0x88] sm:%s27]
      %103 = vst [vmem:[%s35 + $0x84] sm:%s27] %v102
      %v104 = vld [vmem:[%s34 + $0x84] sm:%s27]
      %105 = vst [vmem:[%s35 + $0x88] sm:%s27] %v104
      %v106 = vld [vmem:[%s34 + $0x8c] sm:%s27]
      %107 = vst [vmem:[%s35 + $0x8c] sm:%s27] %v106
      %v108 = vld [vmem:[%s34 + $0x90] sm:%s27]
      %109 = vst [vmem:[%s35 + $0x90] sm:%s27] %v108
      %v110 = vld [vmem:[%s34 + $0x98] sm:%s27]
      %111 = vst [vmem:[%s35 + $0x94] sm:%s27] %v110
      %v112 = vld [vmem:[%s34 + $0x94] sm:%s27]
      %113 = vst [vmem:[%s35 + $0x98] sm:%s27] %v112
      %v114 = vld [vmem:[%s34 + $0x9c] sm:%s27]
      %115 = vst [vmem:[%s35 + $0x9c] sm:%s27] %v114
      %v116 = vld [vmem:[%s34 + $0xa0] sm:%s27]
      %117 = vst [vmem:[%s35 + $0xa0] sm:%s27] %v116
      %v118 = vld [vmem:[%s34 + $0xa8] sm:%s27]
      %119 = vst [vmem:[%s35 + $0xa4] sm:%s27] %v118
      %v120 = vld [vmem:[%s34 + $0xa4] sm:%s27]
      %121 = vst [vmem:[%s35 + $0xa8] sm:%s27] %v120
      %v122 = vld [vmem:[%s34 + $0xac] sm:%s27]
      %123 = vst [vmem:[%s35 + $0xac] sm:%s27] %v122
      %v124 = vld [vmem:[%s34 + $0xb0] sm:%s27]
      %125 = vst [vmem:[%s35 + $0xb0] sm:%s27] %v124
      %v126 = vld [vmem:[%s34 + $0xb8] sm:%s27]
      %127 = vst [vmem:[%s35 + $0xb4] sm:%s27] %v126
      %v128 = vld [vmem:[%s34 + $0xb4] sm:%s27]
      %129 = vst [vmem:[%s35 + $0xb8] sm:%s27] %v128
      %v130 = vld [vmem:[%s34 + $0xbc] sm:%s27]
      %131 = vst [vmem:[%s35 + $0xbc] sm:%s27] %v130
      %v132 = vld [vmem:[%s34 + $0xc0] sm:%s27]
      %133 = vst [vmem:[%s35 + $0xc0] sm:%s27] %v132
      %v134 = vld [vmem:[%s34 + $0xc8] sm:%s27]
      %135 = vst [vmem:[%s35 + $0xc4] sm:%s27] %v134
      %v136 = vld [vmem:[%s34 + $0xc4] sm:%s27]
      %137 = vst [vmem:[%s35 + $0xc8] sm:%s27] %v136
      %v138 = vld [vmem:[%s34 + $0xcc] sm:%s27]
      %139 = vst [vmem:[%s35 + $0xcc] sm:%s27] %v138
      %v140 = vld [vmem:[%s34 + $0xd0] sm:%s27]
      %141 = vst [vmem:[%s35 + $0xd0] sm:%s27] %v140
      %v142 = vld [vmem:[%s34 + $0xd8] sm:%s27]
      %143 = vst [vmem:[%s35 + $0xd4] sm:%s27] %v142
      %v144 = vld [vmem:[%s34 + $0xd4] sm:%s27]
      %145 = vst [vmem:[%s35 + $0xd8] sm:%s27] %v144
      %v146 = vld [vmem:[%s34 + $0xdc] sm:%s27]
      %147 = vst [vmem:[%s35 + $0xdc] sm:%s27] %v146
      %v148 = vld [vmem:[%s34 + $0xe0] sm:%s27]
      %149 = vst [vmem:[%s35 + $0xe0] sm:%s27] %v148
      %v150 = vld [vmem:[%s34 + $0xe8] sm:%s27]
      %151 = vst [vmem:[%s35 + $0xe4] sm:%s27] %v150
      %v152 = vld [vmem:[%s34 + $0xe4] sm:%s27]
      %153 = vst [vmem:[%s35 + $0xe8] sm:%s27] %v152
      %v154 = vld [vmem:[%s34 + $0xec] sm:%s27]
      %155 = vst [vmem:[%s35 + $0xec] sm:%s27] %v154
      %v156 = vld [vmem:[%s34 + $0xf0] sm:%s27]
      %157 = vst [vmem:[%s35 + $0xf0] sm:%s27] %v156
      %v158 = vld [vmem:[%s34 + $0xf8] sm:%s27]
      %159 = vst [vmem:[%s35 + $0xf4] sm:%s27] %v158
      %v160 = vld [vmem:[%s34 + $0xf4] sm:%s27]
      %161 = vst [vmem:[%s35 + $0xf8] sm:%s27] %v160
      %v162 = vld [vmem:[%s34 + $0xfc] sm:%s27]
      %163 = vst [vmem:[%s35 + $0xfc] sm:%s27] %v162
      %v164 = vld [vmem:[%s34 + $0x100] sm:%s27]
      %165 = vst [vmem:[%s35 + $0x100] sm:%s27] %v164
      %v166 = vld [vmem:[%s34 + $0x108] sm:%s27]
      %167 = vst [vmem:[%s35 + $0x104] sm:%s27] %v166
      %v168 = vld [vmem:[%s34 + $0x104] sm:%s27]
      %169 = vst [vmem:[%s35 + $0x108] sm:%s27] %v168
      %v170 = vld [vmem:[%s34 + $0x10c] sm:%s27]
      %171 = vst [vmem:[%s35 + $0x10c] sm:%s27] %v170
      %v172 = vld [vmem:[%s34 + $0x110] sm:%s27]
      %173 = vst [vmem:[%s35 + $0x110] sm:%s27] %v172
      %v174 = vld [vmem:[%s34 + $0x118] sm:%s27]
      %175 = vst [vmem:[%s35 + $0x114] sm:%s27] %v174
      %v176 = vld [vmem:[%s34 + $0x114] sm:%s27]
      %177 = vst [vmem:[%s35 + $0x118] sm:%s27] %v176
      %v178 = vld [vmem:[%s34 + $0x11c] sm:%s27]
      %179 = vst [vmem:[%s35 + $0x11c] sm:%s27] %v178
      %v180 = vld [vmem:[%s34 + $0x120] sm:%s27]
      %181 = vst [vmem:[%s35 + $0x120] sm:%s27] %v180
      %v182 = vld [vmem:[%s34 + $0x128] sm:%s27]
      %183 = vst [vmem:[%s35 + $0x124] sm:%s27] %v182
      %v184 = vld [vmem:[%s34 + $0x124] sm:%s27]
      %185 = vst [vmem:[%s35 + $0x128] sm:%s27] %v184
      %v186 = vld [vmem:[%s34 + $0x12c] sm:%s27]
      %187 = vst [vmem:[%s35 + $0x12c] sm:%s27] %v186
      %v188 = vld [vmem:[%s34 + $0x130] sm:%s27]
      %189 = vst [vmem:[%s35 + $0x130] sm:%s27] %v188
      %v190 = vld [vmem:[%s34 + $0x138] sm:%s27]
      %191 = vst [vmem:[%s35 + $0x134] sm:%s27] %v190
      %v192 = vld [vmem:[%s34 + $0x134] sm:%s27]
      %193 = vst [vmem:[%s35 + $0x138] sm:%s27] %v192
      %v194 = vld [vmem:[%s34 + $0x13c] sm:%s27]
      %195 = vst [vmem:[%s35 + $0x13c] sm:%s27] %v194
      %v196 = vld [vmem:[%s34 + $0x140] sm:%s27]
      %197 = vst [vmem:[%s35 + $0x140] sm:%s27] %v196
      %v198 = vld [vmem:[%s34 + $0x148] sm:%s27]
      %199 = vst [vmem:[%s35 + $0x144] sm:%s27] %v198
      %v200 = vld [vmem:[%s34 + $0x144] sm:%s27]
      %201 = vst [vmem:[%s35 + $0x148] sm:%s27] %v200
      %v202 = vld [vmem:[%s34 + $0x14c] sm:%s27]
      %203 = vst [vmem:[%s35 + $0x14c] sm:%s27] %v202
      %v204 = vld [vmem:[%s34 + $0x150] sm:%s27]
      %205 = vst [vmem:[%s35 + $0x150] sm:%s27] %v204
      %v206 = vld [vmem:[%s34 + $0x158] sm:%s27]
      %207 = vst [vmem:[%s35 + $0x154] sm:%s27] %v206
      %v208 = vld [vmem:[%s34 + $0x154] sm:%s27]
      %209 = vst [vmem:[%s35 + $0x158] sm:%s27] %v208
      %v210 = vld [vmem:[%s34 + $0x15c] sm:%s27]
      %211 = vst [vmem:[%s35 + $0x15c] sm:%s27] %v210
      %v212 = vld [vmem:[%s34 + $0x160] sm:%s27]
      %213 = vst [vmem:[%s35 + $0x160] sm:%s27] %v212
      %v214 = vld [vmem:[%s34 + $0x168] sm:%s27]
      %215 = vst [vmem:[%s35 + $0x164] sm:%s27] %v214
      %v216 = vld [vmem:[%s34 + $0x164] sm:%s27]
      %217 = vst [vmem:[%s35 + $0x168] sm:%s27] %v216
      %v218 = vld [vmem:[%s34 + $0x16c] sm:%s27]
      %219 = vst [vmem:[%s35 + $0x16c] sm:%s27] %v218
      %v220 = vld [vmem:[%s34 + $0x170] sm:%s27]
      %221 = vst [vmem:[%s35 + $0x170] sm:%s27] %v220
      %v222 = vld [vmem:[%s34 + $0x178] sm:%s27]
      %223 = vst [vmem:[%s35 + $0x174] sm:%s27] %v222
      %v224 = vld [vmem:[%s34 + $0x174] sm:%s27]
      %225 = vst [vmem:[%s35 + $0x178] sm:%s27] %v224
      %v226 = vld [vmem:[%s34 + $0x17c] sm:%s27]
      %227 = vst [vmem:[%s35 + $0x17c] sm:%s27] %v226
      %v228 = vld [vmem:[%s34 + $0x180] sm:%s27]
      %229 = vst [vmem:[%s35 + $0x180] sm:%s27] %v228
      %v230 = vld [vmem:[%s34 + $0x188] sm:%s27]
      %231 = vst [vmem:[%s35 + $0x184] sm:%s27] %v230
      %v232 = vld [vmem:[%s34 + $0x184] sm:%s27]
      %233 = vst [vmem:[%s35 + $0x188] sm:%s27] %v232
      %v234 = vld [vmem:[%s34 + $0x18c] sm:%s27]
      %235 = vst [vmem:[%s35 + $0x18c] sm:%s27] %v234
      %v236 = vld [vmem:[%s34 + $0x190] sm:%s27]
      %237 = vst [vmem:[%s35 + $0x190] sm:%s27] %v236
      %v238 = vld [vmem:[%s34 + $0x198] sm:%s27]
      %239 = vst [vmem:[%s35 + $0x194] sm:%s27] %v238
      %v240 = vld [vmem:[%s34 + $0x194] sm:%s27]
      %241 = vst [vmem:[%s35 + $0x198] sm:%s27] %v240
      %v242 = vld [vmem:[%s34 + $0x19c] sm:%s27]
      %243 = vst [vmem:[%s35 + $0x19c] sm:%s27] %v242
      %v244 = vld [vmem:[%s34 + $0x1a0] sm:%s27]
      %245 = vst [vmem:[%s35 + $0x1a0] sm:%s27] %v244
      %v246 = vld [vmem:[%s34 + $0x1a8] sm:%s27]
      %247 = vst [vmem:[%s35 + $0x1a4] sm:%s27] %v246
      %v248 = vld [vmem:[%s34 + $0x1a4] sm:%s27]
      %249 = vst [vmem:[%s35 + $0x1a8] sm:%s27] %v248
      %v250 = vld [vmem:[%s34 + $0x1ac] sm:%s27]
      %251 = vst [vmem:[%s35 + $0x1ac] sm:%s27] %v250
      %v252 = vld [vmem:[%s34 + $0x1b0] sm:%s27]
      %253 = vst [vmem:[%s35 + $0x1b0] sm:%s27] %v252
      %v254 = vld [vmem:[%s34 + $0x1b8] sm:%s27]
      %255 = vst [vmem:[%s35 + $0x1b4] sm:%s27] %v254
      %v256 = vld [vmem:[%s34 + $0x1b4] sm:%s27]
      %257 = vst [vmem:[%s35 + $0x1b8] sm:%s27] %v256
      %v258 = vld [vmem:[%s34 + $0x1bc] sm:%s27]
      %259 = vst [vmem:[%s35 + $0x1bc] sm:%s27] %v258
      %v260 = vld [vmem:[%s34 + $0x1c0] sm:%s27]
      %261 = vst [vmem:[%s35 + $0x1c0] sm:%s27] %v260
      %v262 = vld [vmem:[%s34 + $0x1c8] sm:%s27]
      %263 = vst [vmem:[%s35 + $0x1c4] sm:%s27] %v262
      %v264 = vld [vmem:[%s34 + $0x1c4] sm:%s27]
      %265 = vst [vmem:[%s35 + $0x1c8] sm:%s27] %v264
      %v266 = vld [vmem:[%s34 + $0x1cc] sm:%s27]
      %267 = vst [vmem:[%s35 + $0x1cc] sm:%s27] %v266
      %v268 = vld [vmem:[%s34 + $0x1d0] sm:%s27]
      %269 = vst [vmem:[%s35 + $0x1d0] sm:%s27] %v268
      %v270 = vld [vmem:[%s34 + $0x1d8] sm:%s27]
      %271 = vst [vmem:[%s35 + $0x1d4] sm:%s27] %v270
      %v272 = vld [vmem:[%s34 + $0x1d4] sm:%s27]
      %273 = vst [vmem:[%s35 + $0x1d8] sm:%s27] %v272
      %v274 = vld [vmem:[%s34 + $0x1dc] sm:%s27]
      %275 = vst [vmem:[%s35 + $0x1dc] sm:%s27] %v274
      %v276 = vld [vmem:[%s34 + $0x1e0] sm:%s27]
      %277 = vst [vmem:[%s35 + $0x1e0] sm:%s27] %v276
      %v278 = vld [vmem:[%s34 + $0x1e8] sm:%s27]
      %279 = vst [vmem:[%s35 + $0x1e4] sm:%s27] %v278
      %v280 = vld [vmem:[%s34 + $0x1e4] sm:%s27]
      %281 = vst [vmem:[%s35 + $0x1e8] sm:%s27] %v280
      %v282 = vld [vmem:[%s34 + $0x1ec] sm:%s27]
      %283 = vst [vmem:[%s35 + $0x1ec] sm:%s27] %v282
      %v284 = vld [vmem:[%s34 + $0x1f0] sm:%s27]
      %285 = vst [vmem:[%s35 + $0x1f0] sm:%s27] %v284
      %v286 = vld [vmem:[%s34 + $0x1f8] sm:%s27]
      %287 = vst [vmem:[%s35 + $0x1f4] sm:%s27] %v286
      %v288 = vld [vmem:[%s34 + $0x1f4] sm:%s27]
      %289 = vst [vmem:[%s35 + $0x1f8] sm:%s27] %v288
      %v290 = vld [vmem:[%s34 + $0x1fc] sm:%s27]
      %291 = vst [vmem:[%s35 + $0x1fc] sm:%s27] %v290
      %v292 = vld [vmem:[%s34 + $0x200] sm:%s27]
      %293 = vst [vmem:[%s35 + $0x200] sm:%s27] %v292
      %v294 = vld [vmem:[%s34 + $0x208] sm:%s27]
      %295 = vst [vmem:[%s35 + $0x204] sm:%s27] %v294
      %v296 = vld [vmem:[%s34 + $0x204] sm:%s27]
      %297 = vst [vmem:[%s35 + $0x208] sm:%s27] %v296
      %v298 = vld [vmem:[%s34 + $0x20c] sm:%s27]
      %299 = vst [vmem:[%s35 + $0x20c] sm:%s27] %v298
      %v300 = vld [vmem:[%s34 + $0x210] sm:%s27]
      %301 = vst [vmem:[%s35 + $0x210] sm:%s27] %v300
      %v302 = vld [vmem:[%s34 + $0x218] sm:%s27]
      %303 = vst [vmem:[%s35 + $0x214] sm:%s27] %v302
      %v304 = vld [vmem:[%s34 + $0x214] sm:%s27]
      %305 = vst [vmem:[%s35 + $0x218] sm:%s27] %v304
      %v306 = vld [vmem:[%s34 + $0x21c] sm:%s27]
      %307 = vst [vmem:[%s35 + $0x21c] sm:%s27] %v306
      %v308 = vld [vmem:[%s34 + $0x220] sm:%s27]
      %309 = vst [vmem:[%s35 + $0x220] sm:%s27] %v308
      %v310 = vld [vmem:[%s34 + $0x228] sm:%s27]
      %311 = vst [vmem:[%s35 + $0x224] sm:%s27] %v310
      %v312 = vld [vmem:[%s34 + $0x224] sm:%s27]
      %313 = vst [vmem:[%s35 + $0x228] sm:%s27] %v312
      %v314 = vld [vmem:[%s34 + $0x22c] sm:%s27]
      %315 = vst [vmem:[%s35 + $0x22c] sm:%s27] %v314
      %v316 = vld [vmem:[%s34 + $0x230] sm:%s27]
      %317 = vst [vmem:[%s35 + $0x230] sm:%s27] %v316
      %v318 = vld [vmem:[%s34 + $0x238] sm:%s27]
      %319 = vst [vmem:[%s35 + $0x234] sm:%s27] %v318
      %v320 = vld [vmem:[%s34 + $0x234] sm:%s27]
      %321 = vst [vmem:[%s35 + $0x238] sm:%s27] %v320
      %v322 = vld [vmem:[%s34 + $0x23c] sm:%s27]
      %323 = vst [vmem:[%s35 + $0x23c] sm:%s27] %v322
      %v324 = vld [vmem:[%s34 + $0x240] sm:%s27]
      %325 = vst [vmem:[%s35 + $0x240] sm:%s27] %v324
      %v326 = vld [vmem:[%s34 + $0x248] sm:%s27]
      %327 = vst [vmem:[%s35 + $0x244] sm:%s27] %v326
      %v328 = vld [vmem:[%s34 + $0x244] sm:%s27]
      %329 = vst [vmem:[%s35 + $0x248] sm:%s27] %v328
      %v330 = vld [vmem:[%s34 + $0x24c] sm:%s27]
      %331 = vst [vmem:[%s35 + $0x24c] sm:%s27] %v330
      %v332 = vld [vmem:[%s34 + $0x250] sm:%s27]
      %333 = vst [vmem:[%s35 + $0x250] sm:%s27] %v332
      %v334 = vld [vmem:[%s34 + $0x258] sm:%s27]
      %335 = vst [vmem:[%s35 + $0x254] sm:%s27] %v334
      %v336 = vld [vmem:[%s34 + $0x254] sm:%s27]
      %337 = vst [vmem:[%s35 + $0x258] sm:%s27] %v336
      %v338 = vld [vmem:[%s34 + $0x25c] sm:%s27]
      %339 = vst [vmem:[%s35 + $0x25c] sm:%s27] %v338
      %v340 = vld [vmem:[%s34 + $0x260] sm:%s27]
      %341 = vst [vmem:[%s35 + $0x260] sm:%s27] %v340
      %v342 = vld [vmem:[%s34 + $0x268] sm:%s27]
      %343 = vst [vmem:[%s35 + $0x264] sm:%s27] %v342
      %v344 = vld [vmem:[%s34 + $0x264] sm:%s27]
      %345 = vst [vmem:[%s35 + $0x268] sm:%s27] %v344
      %v346 = vld [vmem:[%s34 + $0x26c] sm:%s27]
      %347 = vst [vmem:[%s35 + $0x26c] sm:%s27] %v346
      %v348 = vld [vmem:[%s34 + $0x270] sm:%s27]
      %349 = vst [vmem:[%s35 + $0x270] sm:%s27] %v348
      %v350 = vld [vmem:[%s34 + $0x278] sm:%s27]
      %351 = vst [vmem:[%s35 + $0x274] sm:%s27] %v350
      %v352 = vld [vmem:[%s34 + $0x274] sm:%s27]
      %353 = vst [vmem:[%s35 + $0x278] sm:%s27] %v352
      %v354 = vld [vmem:[%s34 + $0x27c] sm:%s27]
      %355 = vst [vmem:[%s35 + $0x27c] sm:%s27] %v354
      %v356 = vld [vmem:[%s34 + $0x280] sm:%s27]
      %357 = vst [vmem:[%s35 + $0x280] sm:%s27] %v356
      %v358 = vld [vmem:[%s34 + $0x288] sm:%s27]
      %359 = vst [vmem:[%s35 + $0x284] sm:%s27] %v358
      %v360 = vld [vmem:[%s34 + $0x284] sm:%s27]
      %361 = vst [vmem:[%s35 + $0x288] sm:%s27] %v360
      %v362 = vld [vmem:[%s34 + $0x28c] sm:%s27]
      %363 = vst [vmem:[%s35 + $0x28c] sm:%s27] %v362
      %v364 = vld [vmem:[%s34 + $0x290] sm:%s27]
      %365 = vst [vmem:[%s35 + $0x290] sm:%s27] %v364
      %v366 = vld [vmem:[%s34 + $0x298] sm:%s27]
      %367 = vst [vmem:[%s35 + $0x294] sm:%s27] %v366
      %v368 = vld [vmem:[%s34 + $0x294] sm:%s27]
      %369 = vst [vmem:[%s35 + $0x298] sm:%s27] %v368
      %v370 = vld [vmem:[%s34 + $0x29c] sm:%s27]
      %371 = vst [vmem:[%s35 + $0x29c] sm:%s27] %v370
      %v372 = vld [vmem:[%s34 + $0x2a0] sm:%s27]
      %373 = vst [vmem:[%s35 + $0x2a0] sm:%s27] %v372
      %v374 = vld [vmem:[%s34 + $0x2a8] sm:%s27]
      %375 = vst [vmem:[%s35 + $0x2a4] sm:%s27] %v374
      %v376 = vld [vmem:[%s34 + $0x2a4] sm:%s27]
      %377 = vst [vmem:[%s35 + $0x2a8] sm:%s27] %v376
      %v378 = vld [vmem:[%s34 + $0x2ac] sm:%s27]
      %379 = vst [vmem:[%s35 + $0x2ac] sm:%s27] %v378
      %v380 = vld [vmem:[%s34 + $0x2b0] sm:%s27]
      %381 = vst [vmem:[%s35 + $0x2b0] sm:%s27] %v380
      %v382 = vld [vmem:[%s34 + $0x2b8] sm:%s27]
      %383 = vst [vmem:[%s35 + $0x2b4] sm:%s27] %v382
      %v384 = vld [vmem:[%s34 + $0x2b4] sm:%s27]
      %385 = vst [vmem:[%s35 + $0x2b8] sm:%s27] %v384
      %v386 = vld [vmem:[%s34 + $0x2bc] sm:%s27]
      %387 = vst [vmem:[%s35 + $0x2bc] sm:%s27] %v386
      %v388 = vld [vmem:[%s34 + $0x2c0] sm:%s27]
      %389 = vst [vmem:[%s35 + $0x2c0] sm:%s27] %v388
      %v390 = vld [vmem:[%s34 + $0x2c8] sm:%s27]
      %391 = vst [vmem:[%s35 + $0x2c4] sm:%s27] %v390
      %v392 = vld [vmem:[%s34 + $0x2c4] sm:%s27]
      %393 = vst [vmem:[%s35 + $0x2c8] sm:%s27] %v392
      %v394 = vld [vmem:[%s34 + $0x2cc] sm:%s27]
      %395 = vst [vmem:[%s35 + $0x2cc] sm:%s27] %v394
      %v396 = vld [vmem:[%s34 + $0x2d0] sm:%s27]
      %397 = vst [vmem:[%s35 + $0x2d0] sm:%s27] %v396
      %v398 = vld [vmem:[%s34 + $0x2d8] sm:%s27]
      %399 = vst [vmem:[%s35 + $0x2d4] sm:%s27] %v398
      %v400 = vld [vmem:[%s34 + $0x2d4] sm:%s27]
      %401 = vst [vmem:[%s35 + $0x2d8] sm:%s27] %v400
      %v402 = vld [vmem:[%s34 + $0x2dc] sm:%s27]
      %403 = vst [vmem:[%s35 + $0x2dc] sm:%s27] %v402
      %v404 = vld [vmem:[%s34 + $0x2e0] sm:%s27]
      %405 = vst [vmem:[%s35 + $0x2e0] sm:%s27] %v404
      %v406 = vld [vmem:[%s34 + $0x2e8] sm:%s27]
      %407 = vst [vmem:[%s35 + $0x2e4] sm:%s27] %v406
      %v408 = vld [vmem:[%s34 + $0x2e4] sm:%s27]
      %409 = vst [vmem:[%s35 + $0x2e8] sm:%s27] %v408
      %v410 = vld [vmem:[%s34 + $0x2ec] sm:%s27]
      %411 = vst [vmem:[%s35 + $0x2ec] sm:%s27] %v410
      %v412 = vld [vmem:[%s34 + $0x2f0] sm:%s27]
      %413 = vst [vmem:[%s35 + $0x2f0] sm:%s27] %v412
      %v414 = vld [vmem:[%s34 + $0x2f8] sm:%s27]
      %415 = vst [vmem:[%s35 + $0x2f4] sm:%s27] %v414
      %v416 = vld [vmem:[%s34 + $0x2f4] sm:%s27]
      %417 = vst [vmem:[%s35 + $0x2f8] sm:%s27] %v416
      %v418 = vld [vmem:[%s34 + $0x2fc] sm:%s27]
      %419 = vst [vmem:[%s35 + $0x2fc] sm:%s27] %v418
    $region30: #{simple_disc_forward.1} parent=24 // loop_footer
      %s33 = sadd.s32 1, %s29
    $region31: #{simple_disc_forward.1} parent=24 // loop_footer_branch
      %28 = sbr.rel target = $region27
    $region32: #{simple_disc_forward.1} parent=24 // loop_exit
      _
  $region25: #{simple_disc_forward.1} parent=0 // pred_fallthru
    _
  // Predicated region
  $region51: #{simple_disc_forward.1} parent=0 // pred_check
    _
  $region52: #{simple_disc_forward.1} parent=0 // pred_check_branch
    %833 = sbr.rel (0) target = $region54
  $region53: #{simple_disc_forward.1} parent=0 // pred_region
    %834 = vsyncadd [#allocation3], 12288
  $region54: #{simple_disc_forward.1} parent=0 // pred_fallthru
    _
  %v835 = vld [vmem:[%s1] sm:$0xf]
  %v836 = vld [vmem:[%s0] sm:$0xff]
  %v837 = vld [vmem:[%s0 + $0x8] sm:$0xff]
  %v838 = vld [vmem:[%s0 + $0x10] sm:$0xff]
  %v839 = vld [vmem:[%s0 + $0x18] sm:$0xff]
  %v840 = vld [vmem:[%s0 + $0x20] sm:$0xff]
  %v841 = vld [vmem:[%s0 + $0x28] sm:$0xff]
  %v842 = vld [vmem:[%s0 + $0x30] sm:$0xff]
  %v843 = vld [vmem:[%s0 + $0x38] sm:$0xff]
  %v844 = vld [vmem:[%s0 + $0x40] sm:$0x33]
  %v847 = vunpack.c.l.s4 1983009808
  %v848 = vunpack.c.0.s8 %v847
  %v849 = vlaneseq
  %v850 = vshrl.u32 %v849, 7
  %v851 = vsub.s32 %v848, %v850
  %v852 = vrot.slane %v835, %v851
  %v853 = vcombine.high %v852, %v852
  %v865 = vunpack.c.l.b16 %v836
  %v866 = vunpack.c.h.b16 %v836
  %v867 = vunpack.c.l.b16 %v837
  %v868 = vunpack.c.h.b16 %v837
  %v869 = vunpack.c.l.b16 %v838
  %v870 = vunpack.c.h.b16 %v838
  %v871 = vunpack.c.l.b16 %v839
  %v872 = vunpack.c.h.b16 %v839
  %v873 = vunpack.c.l.b16 %v840
  %v874 = vunpack.c.h.b16 %v840
  %v875 = vunpack.c.l.b16 %v841
  %v876 = vunpack.c.h.b16 %v841
  %v877 = vunpack.c.l.b16 %v842
  %v878 = vunpack.c.h.b16 %v842
  %v879 = vunpack.c.l.b16 %v843
  %v880 = vunpack.c.h.b16 %v843
  %v881 = vunpack.c.l.b16 %v844
  %v882 = vunpack.c.h.b16 %v844
  %v883 = vpack.c.b16 %v867, %v865
  %v884 = vpack.c.b16 %v868, %v866
  %v885 = vpack.c.b16 %v871, %v869
  %v886 = vpack.c.b16 %v872, %v870
  %v887 = vpack.c.b16 %v875, %v873
  %v888 = vpack.c.b16 %v876, %v874
  %v889 = vpack.c.b16 %v879, %v877
  %v890 = vpack.c.b16 %v880, %v878
  %v891 = vpack.c.b16 %v881, %v881
  %v892 = vpack.c.b16 %v882, %v882
  %903 = vmatprep.subr.bf16.mxu0 %v884
  %904 = vmatpush1.bf16.xpose.msra.mxu0 %v883
  %905 = vmatprep.subr.bf16.mxu0 %v886
  %906 = vmatpush1.bf16.xpose.msra.mxu0 %v885
  %907 = vmatprep.subr.bf16.mxu0 %v888
  %908 = vmatpush1.bf16.xpose.msra.mxu0 %v887
  %909 = vmatprep.subr.bf16.mxu0 %v890
  %910 = vmatpush1.bf16.xpose.msra.mxu0 %v889
  %911 = vmatprep.subr.bf16.mxu0 %v892
  %912 = vmatpush1.bf16.xpose.msra.mxu0 %v891
  %913 = vmatprep.subr.bf16.mxu0 0
  %914 = vmatpush1.bf16.xpose.msra.mxu0 0
  %915 = vmatprep.subr.bf16.mxu0 0
  %916 = vmatpush1.bf16.xpose.msra.mxu0 0
  %917 = vmatprep.subr.bf16.mxu0 0
  %918 = vmatpush1.bf16.xpose.msra.mxu0 0
  %919 = vmatprep.subr.bf16.mxu0 0
  %920 = vmatpush1.bf16.xpose.msra.mxu0 0
  %921 = vmatprep.subr.bf16.mxu0 0
  %922 = vmatpush1.bf16.xpose.msra.mxu0 0
  %923 = vmatprep.subr.bf16.mxu0 0
  %924 = vmatpush1.bf16.xpose.msra.mxu0 0
  %925 = vmatprep.subr.bf16.mxu0 0
  %926 = vmatpush1.bf16.xpose.msra.mxu0 0
  %927 = vmatprep.subr.bf16.mxu0 0
  %928 = vmatpush1.bf16.xpose.msra.mxu0 0
  %929 = vmatprep.subr.bf16.mxu0 0
  %930 = vmatpush1.bf16.xpose.msra.mxu0 0
  %931 = vmatprep.subr.bf16.mxu0 0
  %932 = vmatpush1.bf16.xpose.msra.mxu0 0
  %933 = vmatprep.subr.bf16.mxu0 0
  %934 = vmatpush1.bf16.xpose.msra.mxu0 0
  %935 = vmatprep.mubr.bf16.mxu0 %v853
  %936 = vmatmul.mubr.bf16.gmra.mrb[0].mxu0 %v852
  %v937 = vpop.f32.mrb[0].mxu0
  %v938 = vadd.f32 0.0, %v937
  %v939 = vpop.f32.mrb[0].mxu0
  %v940 = vpop.f32.mrb[0].mxu0
  %v941 = vpop.f32.mrb[0].mxu0
  %942 = vdwg.mxu0
  %v943 = vrcp.pop %v938
  %v945 = vrot.slane %v943, 7
  %v947 = vmul.f32 %v938, %v945
  %v948 = vrot.slane %v943, 6
  %v950 = vmul.f32 %v938, %v948
  %v952 = vrot.slane %v950, 1
  %953 = vrot.lane.b32.xlu0 %v952, 68
  %v954 = vpop.permute.xlu0 %953
  %vm956 = vcmask 556032
  %v957 = vsel %vm956, %v947, %v954
  %s958 = scalar_lea.vmem %s0, 72
  %v959 = vld [vmem:[%s958] sm:$0xff]
  %v960 = vld [vmem:[%s958 + $0x8] sm:$0xff]
  %v961 = vld [vmem:[%s958 + $0x10] sm:$0xff]
  %v962 = vld [vmem:[%s958 + $0x18] sm:$0xff]
  %v963 = vld [vmem:[%s958 + $0x20] sm:$0xff]
  %v964 = vld [vmem:[%s958 + $0x28] sm:$0xff]
  %v965 = vld [vmem:[%s958 + $0x30] sm:$0xff]
  %v966 = vld [vmem:[%s958 + $0x38] sm:$0xff]
  %v967 = vld [vmem:[%s958 + $0x40] sm:$0x33]
  %v977 = vunpack.c.l.b16 %v959
  %v978 = vunpack.c.h.b16 %v959
  %v979 = vunpack.c.l.b16 %v960
  %v980 = vunpack.c.h.b16 %v960
  %v981 = vunpack.c.l.b16 %v961
  %v982 = vunpack.c.h.b16 %v961
  %v983 = vunpack.c.l.b16 %v962
  %v984 = vunpack.c.h.b16 %v962
  %v985 = vunpack.c.l.b16 %v963
  %v986 = vunpack.c.h.b16 %v963
  %v987 = vunpack.c.l.b16 %v964
  %v988 = vunpack.c.h.b16 %v964
  %v989 = vunpack.c.l.b16 %v965
  %v990 = vunpack.c.h.b16 %v965
  %v991 = vunpack.c.l.b16 %v966
  %v992 = vunpack.c.h.b16 %v966
  %v993 = vunpack.c.l.b16 %v967
  %v994 = vunpack.c.h.b16 %v967
  %v995 = vpack.c.b16 %v979, %v977
  %v996 = vpack.c.b16 %v980, %v978
  %v997 = vpack.c.b16 %v983, %v981
  %v998 = vpack.c.b16 %v984, %v982
  %v999 = vpack.c.b16 %v987, %v985
  %v1000 = vpack.c.b16 %v988, %v986
  %v1001 = vpack.c.b16 %v991, %v989
  %v1002 = vpack.c.b16 %v992, %v990
  %v1003 = vpack.c.b16 %v993, %v993
  %v1004 = vpack.c.b16 %v994, %v994
  %1015 = vmatprep.subr.bf16.mxu0 %v996
  %1016 = vmatpush1.bf16.xpose.msra.mxu0 %v995
  %1017 = vmatprep.subr.bf16.mxu0 %v998
  %1018 = vmatpush1.bf16.xpose.msra.mxu0 %v997
  %1019 = vmatprep.subr.bf16.mxu0 %v1000
  %1020 = vmatpush1.bf16.xpose.msra.mxu0 %v999
  %1021 = vmatprep.subr.bf16.mxu0 %v1002
  %1022 = vmatpush1.bf16.xpose.msra.mxu0 %v1001
  %1023 = vmatprep.subr.bf16.mxu0 %v1004
  %1024 = vmatpush1.bf16.xpose.msra.mxu0 %v1003
  %1025 = vmatprep.subr.bf16.mxu0 0
  %1026 = vmatpush1.bf16.xpose.msra.mxu0 0
  %1027 = vmatprep.subr.bf16.mxu0 0
  %1028 = vmatpush1.bf16.xpose.msra.mxu0 0
  %1029 = vmatprep.subr.bf16.mxu0 0
  %1030 = vmatpush1.bf16.xpose.msra.mxu0 0
  %1031 = vmatprep.subr.bf16.mxu0 0
  %1032 = vmatpush1.bf16.xpose.msra.mxu0 0
  %1033 = vmatprep.subr.bf16.mxu0 0
  %1034 = vmatpush1.bf16.xpose.msra.mxu0 0
  %1035 = vmatprep.subr.bf16.mxu0 0
  %1036 = vmatpush1.bf16.xpose.msra.mxu0 0
  %1037 = vmatprep.subr.bf16.mxu0 0
  %1038 = vmatpush1.bf16.xpose.msra.mxu0 0
  %1039 = vmatprep.subr.bf16.mxu0 0
  %1040 = vmatpush1.bf16.xpose.msra.mxu0 0
  %1041 = vmatprep.subr.bf16.mxu0 0
  %1042 = vmatpush1.bf16.xpose.msra.mxu0 0
  %1043 = vmatprep.subr.bf16.mxu0 0
  %1044 = vmatpush1.bf16.xpose.msra.mxu0 0
  %1045 = vmatprep.subr.bf16.mxu0 0
  %1046 = vmatpush1.bf16.xpose.msra.mxu0 0
  %1047 = vmatprep.mubr.bf16.mxu0 %v853
  %1048 = vmatmul.mubr.bf16.gmra.mrb[0].mxu0 %v852
  %v1049 = vpop.f32.mrb[0].mxu0
  %v1050 = vadd.f32 0.0, %v1049
  %v1051 = vpop.f32.mrb[0].mxu0
  %v1052 = vpop.f32.mrb[0].mxu0
  %v1053 = vpop.f32.mrb[0].mxu0
  %1054 = vdwg.mxu0
  %v1055 = vrcp.pop %v1050
  %v1057 = vrot.slane %v1055, 7
  %v1059 = vmul.f32 %v1050, %v1057
  %v1060 = vrot.slane %v1055, 6
  %v1062 = vmul.f32 %v1050, %v1060
  %v1064 = vrot.slane %v1062, 1
  %1065 = vrot.lane.b32.xlu0 %v1064, 68
  %v1066 = vpop.permute.xlu0 %1065
  %v1068 = vsel %vm956, %v1059, %v1066
  %v1070 = vrot.slane %v957, 1
  %v1071 = vrot.slane %v954, 1
  %vm1074 = vcmask 1040384
  %v1075 = vsel %vm1074, %v1070, %v1068
  %v1076 = vsel %vm1074, %v1071, %v1066
  %v1077 = vpack.c.bf16 %v1075, %v1075
  %v1078 = vpack.c.bf16 %v1076, %v1076
  %v1079 = vld [vmem:[%s2] sm:$0xff]
  %v1080 = vld [vmem:[%s2 + $0x8] sm:$0xff]
  %v1081 = vld [vmem:[%s2 + $0x10] sm:$0xff]
  %v1082 = vld [vmem:[%s2 + $0x18] sm:$0xff]
  %v1083 = vld [vmem:[%s2 + $0x20] sm:$0xff]
  %v1084 = vld [vmem:[%s2 + $0x28] sm:$0xff]
  %v1085 = vld [vmem:[%s2 + $0x30] sm:$0xff]
  %v1086 = vld [vmem:[%s2 + $0x38] sm:$0xff]
  %v1087 = vld [vmem:[%s2 + $0x40] sm:$0xff]
  %v1088 = vld [vmem:[%s2 + $0x48] sm:$0xff]
  %v1089 = vld [vmem:[%s2 + $0x50] sm:$0xff]
  %v1090 = vld [vmem:[%s2 + $0x58] sm:$0xff]
  %v1091 = vld [vmem:[%s2 + $0x60] sm:$0xff]
  %v1092 = vld [vmem:[%s2 + $0x68] sm:$0xff]
  %v1093 = vld [vmem:[%s2 + $0x70] sm:$0xff]
  %v1094 = vld [vmem:[%s2 + $0x78] sm:$0xff]
  %v1095 = vld [vmem:[%s2 + $0x80] sm:$0xff]
  %v1096 = vld [vmem:[%s4] ss:$8 sm:$0x3]
  %v1098 = vlaneseq
  %v1099 = vshrl.u32 %v1098, 7
  %v1100 = vsub.s32 0, %v1099
  %v1101 = vrot.slane %v1096, %v1100
  %v1102 = vlaneseq
  %v1103 = vshrl.u32 %v1102, 7
  %v1104 = vsub.s32 1, %v1103
  %v1105 = vrot.slane %v1096, %v1104
  %v1125 = vunpack.c.l.b16 %v1079
  %v1126 = vunpack.c.h.b16 %v1079
  %v1127 = vunpack.c.l.b16 %v1080
  %v1128 = vunpack.c.h.b16 %v1080
  %v1129 = vunpack.c.l.b16 %v1081
  %v1130 = vunpack.c.h.b16 %v1081
  %v1131 = vunpack.c.l.b16 %v1082
  %v1132 = vunpack.c.h.b16 %v1082
  %v1133 = vunpack.c.l.b16 %v1083
  %v1134 = vunpack.c.h.b16 %v1083
  %v1135 = vunpack.c.l.b16 %v1084
  %v1136 = vunpack.c.h.b16 %v1084
  %v1137 = vunpack.c.l.b16 %v1085
  %v1138 = vunpack.c.h.b16 %v1085
  %v1139 = vunpack.c.l.b16 %v1086
  %v1140 = vunpack.c.h.b16 %v1086
  %v1141 = vunpack.c.l.b16 %v1087
  %v1142 = vunpack.c.h.b16 %v1087
  %v1143 = vunpack.c.l.b16 %v1088
  %v1144 = vunpack.c.h.b16 %v1088
  %v1145 = vunpack.c.l.b16 %v1089
  %v1146 = vunpack.c.h.b16 %v1089
  %v1147 = vunpack.c.l.b16 %v1090
  %v1148 = vunpack.c.h.b16 %v1090
  %v1149 = vunpack.c.l.b16 %v1091
  %v1150 = vunpack.c.h.b16 %v1091
  %v1151 = vunpack.c.l.b16 %v1092
  %v1152 = vunpack.c.h.b16 %v1092
  %v1153 = vunpack.c.l.b16 %v1093
  %v1154 = vunpack.c.h.b16 %v1093
  %v1155 = vunpack.c.l.b16 %v1094
  %v1156 = vunpack.c.h.b16 %v1094
  %v1157 = vunpack.c.l.b16 %v1095
  %v1158 = vunpack.c.h.b16 %v1095
  %v1159 = vpack.c.b16 %v1127, %v1125
  %v1160 = vpack.c.b16 %v1128, %v1126
  %v1161 = vpack.c.b16 %v1131, %v1129
  %v1162 = vpack.c.b16 %v1132, %v1130
  %v1163 = vpack.c.b16 %v1135, %v1133
  %v1164 = vpack.c.b16 %v1136, %v1134
  %v1165 = vpack.c.b16 %v1139, %v1137
  %v1166 = vpack.c.b16 %v1140, %v1138
  %v1167 = vpack.c.b16 %v1143, %v1141
  %v1168 = vpack.c.b16 %v1144, %v1142
  %v1169 = vpack.c.b16 %v1147, %v1145
  %v1170 = vpack.c.b16 %v1148, %v1146
  %v1171 = vpack.c.b16 %v1151, %v1149
  %v1172 = vpack.c.b16 %v1152, %v1150
  %v1173 = vpack.c.b16 %v1155, %v1153
  %v1174 = vpack.c.b16 %v1156, %v1154
  %v1175 = vpack.c.b16 %v1157, %v1157
  %v1176 = vpack.c.b16 %v1158, %v1158
  %vm1193 = vcmask 64512
  %v1195 = vsel %vm1193, %v1078, 0
  %vm1197 = vcmask 1043456
  %v1199 = vsel %vm1197, %v1175, 0
  %v1202 = vsel %vm1197, %v1176, 0
  %1204 = vmatprep.subr.bf16.mxu0 %v1160
  %1205 = vmatpush1.bf16.msra.mxu0 %v1159
  %1206 = vmatprep.subr.bf16.mxu0 %v1162
  %1207 = vmatpush1.bf16.msra.mxu0 %v1161
  %1208 = vmatprep.subr.bf16.mxu0 %v1164
  %1209 = vmatpush1.bf16.msra.mxu0 %v1163
  %1210 = vmatprep.subr.bf16.mxu0 %v1166
  %1211 = vmatpush1.bf16.msra.mxu0 %v1165
  %1212 = vmatprep.subr.bf16.mxu0 %v1168
  %1213 = vmatpush1.bf16.msra.mxu0 %v1167
  %1214 = vmatprep.subr.bf16.mxu0 %v1170
  %1215 = vmatpush1.bf16.msra.mxu0 %v1169
  %1216 = vmatprep.subr.bf16.mxu0 %v1172
  %1217 = vmatpush1.bf16.msra.mxu0 %v1171
  %1218 = vmatprep.subr.bf16.mxu0 %v1174
  %1219 = vmatpush1.bf16.msra.mxu0 %v1173
  %1220 = vmatprep.subr.bf16.mxu0 %v1202
  %1221 = vmatpush1.bf16.msra.mxu0 %v1199
  %1222 = vmatprep.subr.bf16.mxu0 0
  %1223 = vmatpush1.bf16.msra.mxu0 0
  %1224 = vmatprep.subr.bf16.mxu0 0
  %1225 = vmatpush1.bf16.msra.mxu0 0
  %1226 = vmatprep.subr.bf16.mxu0 0
  %1227 = vmatpush1.bf16.msra.mxu0 0
  %1228 = vmatprep.subr.bf16.mxu0 0
  %1229 = vmatpush1.bf16.msra.mxu0 0
  %1230 = vmatprep.subr.bf16.mxu0 0
  %1231 = vmatpush1.bf16.msra.mxu0 0
  %1232 = vmatprep.subr.bf16.mxu0 0
  %1233 = vmatpush1.bf16.msra.mxu0 0
  %1234 = vmatprep.subr.bf16.mxu0 0
  %1235 = vmatpush1.bf16.msra.mxu0 0
  %1236 = vmatprep.mubr.bf16.mxu0 %v1195
  %1237 = vmatmul.mubr.bf16.gmra.mrb[0].mxu0 %v1077
  %v1238 = vpop.f32.mrb[0].mxu0
  %v1239 = vadd.f32 %v1101, %v1238
  %v1240 = vpop.f32.mrb[0].mxu0
  %v1241 = vadd.f32 %v1105, %v1240
  %v1242 = vpop.f32.mrb[0].mxu0
  %v1243 = vpop.f32.mrb[0].mxu0
  %1244 = vdwg.mxu0
  %vm1245 = vcmp.ge.f32.partialorder %v1239, 0.0
  %vm1246 = vcmp.ge.f32.partialorder %v1241, 0.0
  %v1247 = vmul.f32 %v1239, 0.2
  %v1248 = vmul.f32 %v1241, 0.2
  %v1249 = vsel %vm1245, %v1239, %v1247
  %v1250 = vsel %vm1246, %v1241, %v1248
  %v1251 = vmul.f32 %v1249, 1.4142135
  %v1252 = vmul.f32 %v1250, 1.4142135
  %s1253 = smul.u32 4, 3
  %s1254 = smul.u32 %s1253, 32
  %s1255 = smul.u32 %s1254, 2
  %s1256 = sshll.u32 %s1255, 4
  %1257 = dma.done [#allocation3], %s1256
  %v1258 = vpack.c.bf16 %v1251, %v1251
  %v1259 = vpack.c.bf16 %v1252, %v1252
  %v1260 = vld [vmem:[#allocation2] sm:$0xff]
  %v1261 = vld [vmem:[#allocation2 + $0x8] sm:$0xff]
  %v1262 = vld [vmem:[#allocation2 + $0x10] sm:$0xff]
  %v1263 = vld [vmem:[#allocation2 + $0x18] sm:$0xff]
  %v1264 = vld [vmem:[#allocation2 + $0x20] sm:$0xff]
  %v1265 = vld [vmem:[#allocation2 + $0x28] sm:$0xff]
  %v1266 = vld [vmem:[#allocation2 + $0x30] sm:$0xff]
  %v1267 = vld [vmem:[#allocation2 + $0x38] sm:$0xff]
  %v1268 = vld [vmem:[#allocation2 + $0x40] sm:$0xff]
  %v1269 = vld [vmem:[#allocation2 + $0x48] sm:$0xff]
  %v1270 = vld [vmem:[#allocation2 + $0x50] sm:$0xff]
  %v1271 = vld [vmem:[#allocation2 + $0x58] sm:$0xff]
  %v1272 = vld [vmem:[#allocation2 + $0x60] sm:$0xff]
  %v1273 = vld [vmem:[#allocation2 + $0x68] sm:$0xff]
  %v1274 = vld [vmem:[#allocation2 + $0x70] sm:$0xff]
  %v1275 = vld [vmem:[#allocation2 + $0x78] sm:$0xff]
  %v1276 = vld [vmem:[#allocation2 + $0x80] sm:$0xff]
  %v1277 = vld [vmem:[#allocation2 + $0x88] sm:$0xff]
  %v1278 = vld [vmem:[#allocation2 + $0x90] sm:$0xff]
  %v1279 = vld [vmem:[#allocation2 + $0x98] sm:$0xff]
  %v1280 = vld [vmem:[#allocation2 + $0xa0] sm:$0xff]
  %v1281 = vld [vmem:[#allocation2 + $0xa8] sm:$0xff]
  %v1282 = vld [vmem:[#allocation2 + $0xb0] sm:$0xff]
  %v1283 = vld [vmem:[#allocation2 + $0xb8] sm:$0xff]
  %v1284 = vld [vmem:[#allocation2 + $0xc0] sm:$0xff]
  %v1285 = vld [vmem:[#allocation2 + $0xc8] sm:$0xff]
  %v1286 = vld [vmem:[#allocation2 + $0xd0] sm:$0xff]
  %v1287 = vld [vmem:[#allocation2 + $0xd8] sm:$0xff]
  %v1288 = vld [vmem:[#allocation2 + $0xe0] sm:$0xff]
  %v1289 = vld [vmem:[#allocation2 + $0xe8] sm:$0xff]
  %v1290 = vld [vmem:[#allocation2 + $0xf0] sm:$0xff]
  %v1291 = vld [vmem:[#allocation2 + $0xf8] sm:$0xff]
  %s1292 = scalar_lea.vmem %s4, 1
  %v1293 = vld [vmem:[%s1292] ss:$8 sm:$0x3]
  %v1295 = vlaneseq
  %v1296 = vshrl.u32 %v1295, 7
  %v1297 = vsub.s32 0, %v1296
  %v1298 = vrot.slane %v1293, %v1297
  %v1299 = vlaneseq
  %v1300 = vshrl.u32 %v1299, 7
  %v1301 = vsub.s32 1, %v1300
  %v1302 = vrot.slane %v1293, %v1301
  %1305 = vmatprep.subr.bf16.mxu0 %v1261
  %1306 = vmatpush1.bf16.msra.mxu0 %v1260
  %1307 = vmatprep.subr.bf16.mxu0 %v1263
  %1308 = vmatpush1.bf16.msra.mxu0 %v1262
  %1309 = vmatprep.subr.bf16.mxu0 %v1265
  %1310 = vmatpush1.bf16.msra.mxu0 %v1264
  %1311 = vmatprep.subr.bf16.mxu0 %v1267
  %1312 = vmatpush1.bf16.msra.mxu0 %v1266
  %1313 = vmatprep.subr.bf16.mxu0 %v1269
  %1314 = vmatpush1.bf16.msra.mxu0 %v1268
  %1315 = vmatprep.subr.bf16.mxu0 %v1271
  %1316 = vmatpush1.bf16.msra.mxu0 %v1270
  %1317 = vmatprep.subr.bf16.mxu0 %v1273
  %1318 = vmatpush1.bf16.msra.mxu0 %v1272
  %1319 = vmatprep.subr.bf16.mxu0 %v1275
  %1320 = vmatpush1.bf16.msra.mxu0 %v1274
  %1321 = vmatprep.subr.bf16.mxu0 %v1277
  %1322 = vmatpush1.bf16.msra.mxu0 %v1276
  %1323 = vmatprep.subr.bf16.mxu0 %v1279
  %1324 = vmatpush1.bf16.msra.mxu0 %v1278
  %1325 = vmatprep.subr.bf16.mxu0 %v1281
  %1326 = vmatpush1.bf16.msra.mxu0 %v1280
  %1327 = vmatprep.subr.bf16.mxu0 %v1283
  %1328 = vmatpush1.bf16.msra.mxu0 %v1282
  %1329 = vmatprep.subr.bf16.mxu0 %v1285
  %1330 = vmatpush1.bf16.msra.mxu0 %v1284
  %1331 = vmatprep.subr.bf16.mxu0 %v1287
  %1332 = vmatpush1.bf16.msra.mxu0 %v1286
  %1333 = vmatprep.subr.bf16.mxu0 %v1289
  %1334 = vmatpush1.bf16.msra.mxu0 %v1288
  %1335 = vmatprep.subr.bf16.mxu0 %v1291
  %1336 = vmatpush1.bf16.msra.mxu0 %v1290
  %1337 = vmatprep.mubr.bf16.mxu0 %v1259
  %1338 = vmatmul.mubr.bf16.gmra.mrb[0].mxu0 %v1258
  %v1339 = vpop.f32.mrb[0].mxu0
  %v1340 = vadd.f32 %v1298, %v1339
  %v1341 = vpop.f32.mrb[0].mxu0
  %v1342 = vadd.f32 %v1302, %v1341
  %v1343 = vpop.f32.mrb[0].mxu0
  %v1344 = vpop.f32.mrb[0].mxu0
  %1345 = vdwg.mxu0
  %vm1346 = vcmp.ge.f32.partialorder %v1340, 0.0
  %vm1347 = vcmp.ge.f32.partialorder %v1342, 0.0
  %v1348 = vmul.f32 %v1340, 0.2
  %v1349 = vmul.f32 %v1342, 0.2
  %v1350 = vsel %vm1346, %v1340, %v1348
  %v1351 = vsel %vm1347, %v1342, %v1349
  %v1352 = vmul.f32 %v1350, 1.4142135
  %v1353 = vmul.f32 %v1351, 1.4142135
  %v1354 = vpack.c.bf16 %v1352, %v1352
  %v1355 = vpack.c.bf16 %v1353, %v1353
  %s1356 = scalar_lea.vmem [#allocation2], 256
  %v1357 = vld [vmem:[%s1356] sm:$0xff]
  %v1358 = vld [vmem:[%s1356 + $0x8] sm:$0xff]
  %v1359 = vld [vmem:[%s1356 + $0x10] sm:$0xff]
  %v1360 = vld [vmem:[%s1356 + $0x18] sm:$0xff]
  %v1361 = vld [vmem:[%s1356 + $0x20] sm:$0xff]
  %v1362 = vld [vmem:[%s1356 + $0x28] sm:$0xff]
  %v1363 = vld [vmem:[%s1356 + $0x30] sm:$0xff]
  %v1364 = vld [vmem:[%s1356 + $0x38] sm:$0xff]
  %v1365 = vld [vmem:[%s1356 + $0x40] sm:$0xff]
  %v1366 = vld [vmem:[%s1356 + $0x48] sm:$0xff]
  %v1367 = vld [vmem:[%s1356 + $0x50] sm:$0xff]
  %v1368 = vld [vmem:[%s1356 + $0x58] sm:$0xff]
  %v1369 = vld [vmem:[%s1356 + $0x60] sm:$0xff]
  %v1370 = vld [vmem:[%s1356 + $0x68] sm:$0xff]
  %v1371 = vld [vmem:[%s1356 + $0x70] sm:$0xff]
  %v1372 = vld [vmem:[%s1356 + $0x78] sm:$0xff]
  %v1373 = vld [vmem:[%s1356 + $0x80] sm:$0xff]
  %v1374 = vld [vmem:[%s1356 + $0x88] sm:$0xff]
  %v1375 = vld [vmem:[%s1356 + $0x90] sm:$0xff]
  %v1376 = vld [vmem:[%s1356 + $0x98] sm:$0xff]
  %v1377 = vld [vmem:[%s1356 + $0xa0] sm:$0xff]
  %v1378 = vld [vmem:[%s1356 + $0xa8] sm:$0xff]
  %v1379 = vld [vmem:[%s1356 + $0xb0] sm:$0xff]
  %v1380 = vld [vmem:[%s1356 + $0xb8] sm:$0xff]
  %v1381 = vld [vmem:[%s1356 + $0xc0] sm:$0xff]
  %v1382 = vld [vmem:[%s1356 + $0xc8] sm:$0xff]
  %v1383 = vld [vmem:[%s1356 + $0xd0] sm:$0xff]
  %v1384 = vld [vmem:[%s1356 + $0xd8] sm:$0xff]
  %v1385 = vld [vmem:[%s1356 + $0xe0] sm:$0xff]
  %v1386 = vld [vmem:[%s1356 + $0xe8] sm:$0xff]
  %v1387 = vld [vmem:[%s1356 + $0xf0] sm:$0xff]
  %v1388 = vld [vmem:[%s1356 + $0xf8] sm:$0xff]
  %s1389 = scalar_lea.vmem %s4, 2
  %v1390 = vld [vmem:[%s1389] ss:$8 sm:$0x3]
  %v1392 = vlaneseq
  %v1393 = vshrl.u32 %v1392, 7
  %v1394 = vsub.s32 0, %v1393
  %v1395 = vrot.slane %v1390, %v1394
  %v1396 = vlaneseq
  %v1397 = vshrl.u32 %v1396, 7
  %v1398 = vsub.s32 1, %v1397
  %v1399 = vrot.slane %v1390, %v1398
  %1402 = vmatprep.subr.bf16.mxu0 %v1358
  %1403 = vmatpush1.bf16.msra.mxu0 %v1357
  %1404 = vmatprep.subr.bf16.mxu0 %v1360
  %1405 = vmatpush1.bf16.msra.mxu0 %v1359
  %1406 = vmatprep.subr.bf16.mxu0 %v1362
  %1407 = vmatpush1.bf16.msra.mxu0 %v1361
  %1408 = vmatprep.subr.bf16.mxu0 %v1364
  %1409 = vmatpush1.bf16.msra.mxu0 %v1363
  %1410 = vmatprep.subr.bf16.mxu0 %v1366
  %1411 = vmatpush1.bf16.msra.mxu0 %v1365
  %1412 = vmatprep.subr.bf16.mxu0 %v1368
  %1413 = vmatpush1.bf16.msra.mxu0 %v1367
  %1414 = vmatprep.subr.bf16.mxu0 %v1370
  %1415 = vmatpush1.bf16.msra.mxu0 %v1369
  %1416 = vmatprep.subr.bf16.mxu0 %v1372
  %1417 = vmatpush1.bf16.msra.mxu0 %v1371
  %1418 = vmatprep.subr.bf16.mxu0 %v1374
  %1419 = vmatpush1.bf16.msra.mxu0 %v1373
  %1420 = vmatprep.subr.bf16.mxu0 %v1376
  %1421 = vmatpush1.bf16.msra.mxu0 %v1375
  %1422 = vmatprep.subr.bf16.mxu0 %v1378
  %1423 = vmatpush1.bf16.msra.mxu0 %v1377
  %1424 = vmatprep.subr.bf16.mxu0 %v1380
  %1425 = vmatpush1.bf16.msra.mxu0 %v1379
  %1426 = vmatprep.subr.bf16.mxu0 %v1382
  %1427 = vmatpush1.bf16.msra.mxu0 %v1381
  %1428 = vmatprep.subr.bf16.mxu0 %v1384
  %1429 = vmatpush1.bf16.msra.mxu0 %v1383
  %1430 = vmatprep.subr.bf16.mxu0 %v1386
  %1431 = vmatpush1.bf16.msra.mxu0 %v1385
  %1432 = vmatprep.subr.bf16.mxu0 %v1388
  %1433 = vmatpush1.bf16.msra.mxu0 %v1387
  %1434 = vmatprep.mubr.bf16.mxu0 %v1355
  %1435 = vmatmul.mubr.bf16.gmra.mrb[0].mxu0 %v1354
  %v1436 = vpop.f32.mrb[0].mxu0
  %v1437 = vadd.f32 %v1395, %v1436
  %v1438 = vpop.f32.mrb[0].mxu0
  %v1439 = vadd.f32 %v1399, %v1438
  %v1440 = vpop.f32.mrb[0].mxu0
  %v1441 = vpop.f32.mrb[0].mxu0
  %1442 = vdwg.mxu0
  %vm1443 = vcmp.ge.f32.partialorder %v1437, 0.0
  %vm1444 = vcmp.ge.f32.partialorder %v1439, 0.0
  %v1445 = vmul.f32 %v1437, 0.2
  %v1446 = vmul.f32 %v1439, 0.2
  %v1447 = vsel %vm1443, %v1437, %v1445
  %v1448 = vsel %vm1444, %v1439, %v1446
  %v1449 = vmul.f32 %v1447, 1.4142135
  %v1450 = vmul.f32 %v1448, 1.4142135
  %v1451 = vpack.c.bf16 %v1449, %v1449
  %v1452 = vpack.c.bf16 %v1450, %v1450
  %s1453 = scalar_lea.vmem [#allocation2], 512
  %v1454 = vld [vmem:[%s1453] sm:$0xff]
  %v1455 = vld [vmem:[%s1453 + $0x8] sm:$0xff]
  %v1456 = vld [vmem:[%s1453 + $0x10] sm:$0xff]
  %v1457 = vld [vmem:[%s1453 + $0x18] sm:$0xff]
  %v1458 = vld [vmem:[%s1453 + $0x20] sm:$0xff]
  %v1459 = vld [vmem:[%s1453 + $0x28] sm:$0xff]
  %v1460 = vld [vmem:[%s1453 + $0x30] sm:$0xff]
  %v1461 = vld [vmem:[%s1453 + $0x38] sm:$0xff]
  %v1462 = vld [vmem:[%s1453 + $0x40] sm:$0xff]
  %v1463 = vld [vmem:[%s1453 + $0x48] sm:$0xff]
  %v1464 = vld [vmem:[%s1453 + $0x50] sm:$0xff]
  %v1465 = vld [vmem:[%s1453 + $0x58] sm:$0xff]
  %v1466 = vld [vmem:[%s1453 + $0x60] sm:$0xff]
  %v1467 = vld [vmem:[%s1453 + $0x68] sm:$0xff]
  %v1468 = vld [vmem:[%s1453 + $0x70] sm:$0xff]
  %v1469 = vld [vmem:[%s1453 + $0x78] sm:$0xff]
  %v1470 = vld [vmem:[%s1453 + $0x80] sm:$0xff]
  %v1471 = vld [vmem:[%s1453 + $0x88] sm:$0xff]
  %v1472 = vld [vmem:[%s1453 + $0x90] sm:$0xff]
  %v1473 = vld [vmem:[%s1453 + $0x98] sm:$0xff]
  %v1474 = vld [vmem:[%s1453 + $0xa0] sm:$0xff]
  %v1475 = vld [vmem:[%s1453 + $0xa8] sm:$0xff]
  %v1476 = vld [vmem:[%s1453 + $0xb0] sm:$0xff]
  %v1477 = vld [vmem:[%s1453 + $0xb8] sm:$0xff]
  %v1478 = vld [vmem:[%s1453 + $0xc0] sm:$0xff]
  %v1479 = vld [vmem:[%s1453 + $0xc8] sm:$0xff]
  %v1480 = vld [vmem:[%s1453 + $0xd0] sm:$0xff]
  %v1481 = vld [vmem:[%s1453 + $0xd8] sm:$0xff]
  %v1482 = vld [vmem:[%s1453 + $0xe0] sm:$0xff]
  %v1483 = vld [vmem:[%s1453 + $0xe8] sm:$0xff]
  %v1484 = vld [vmem:[%s1453 + $0xf0] sm:$0xff]
  %v1485 = vld [vmem:[%s1453 + $0xf8] sm:$0xff]
  %s1486 = scalar_lea.vmem %s4, 3
  %v1487 = vld [vmem:[%s1486] ss:$8 sm:$0x3]
  %v1489 = vlaneseq
  %v1490 = vshrl.u32 %v1489, 7
  %v1491 = vsub.s32 0, %v1490
  %v1492 = vrot.slane %v1487, %v1491
  %v1493 = vlaneseq
  %v1494 = vshrl.u32 %v1493, 7
  %v1495 = vsub.s32 1, %v1494
  %v1496 = vrot.slane %v1487, %v1495
  %1499 = vmatprep.subr.bf16.mxu0 %v1455
  %1500 = vmatpush1.bf16.msra.mxu0 %v1454
  %1501 = vmatprep.subr.bf16.mxu0 %v1457
  %1502 = vmatpush1.bf16.msra.mxu0 %v1456
  %1503 = vmatprep.subr.bf16.mxu0 %v1459
  %1504 = vmatpush1.bf16.msra.mxu0 %v1458
  %1505 = vmatprep.subr.bf16.mxu0 %v1461
  %1506 = vmatpush1.bf16.msra.mxu0 %v1460
  %1507 = vmatprep.subr.bf16.mxu0 %v1463
  %1508 = vmatpush1.bf16.msra.mxu0 %v1462
  %1509 = vmatprep.subr.bf16.mxu0 %v1465
  %1510 = vmatpush1.bf16.msra.mxu0 %v1464
  %1511 = vmatprep.subr.bf16.mxu0 %v1467
  %1512 = vmatpush1.bf16.msra.mxu0 %v1466
  %1513 = vmatprep.subr.bf16.mxu0 %v1469
  %1514 = vmatpush1.bf16.msra.mxu0 %v1468
  %1515 = vmatprep.subr.bf16.mxu0 %v1471
  %1516 = vmatpush1.bf16.msra.mxu0 %v1470
  %1517 = vmatprep.subr.bf16.mxu0 %v1473
  %1518 = vmatpush1.bf16.msra.mxu0 %v1472
  %1519 = vmatprep.subr.bf16.mxu0 %v1475
  %1520 = vmatpush1.bf16.msra.mxu0 %v1474
  %1521 = vmatprep.subr.bf16.mxu0 %v1477
  %1522 = vmatpush1.bf16.msra.mxu0 %v1476
  %1523 = vmatprep.subr.bf16.mxu0 %v1479
  %1524 = vmatpush1.bf16.msra.mxu0 %v1478
  %1525 = vmatprep.subr.bf16.mxu0 %v1481
  %1526 = vmatpush1.bf16.msra.mxu0 %v1480
  %1527 = vmatprep.subr.bf16.mxu0 %v1483
  %1528 = vmatpush1.bf16.msra.mxu0 %v1482
  %1529 = vmatprep.subr.bf16.mxu0 %v1485
  %1530 = vmatpush1.bf16.msra.mxu0 %v1484
  %1531 = vmatprep.mubr.bf16.mxu0 %v1452
  %1532 = vmatmul.mubr.bf16.gmra.mrb[0].mxu0 %v1451
  %v1533 = vpop.f32.mrb[0].mxu0
  %v1534 = vadd.f32 %v1492, %v1533
  %v1535 = vpop.f32.mrb[0].mxu0
  %v1536 = vadd.f32 %v1496, %v1535
  %v1537 = vpop.f32.mrb[0].mxu0
  %v1538 = vpop.f32.mrb[0].mxu0
  %1539 = vdwg.mxu0
  %vm1540 = vcmp.ge.f32.partialorder %v1534, 0.0
  %vm1541 = vcmp.ge.f32.partialorder %v1536, 0.0
  %v1542 = vmul.f32 %v1534, 0.2
  %v1543 = vmul.f32 %v1536, 0.2
  %v1544 = vsel %vm1540, %v1534, %v1542
  %v1545 = vsel %vm1541, %v1536, %v1543
  %v1546 = vmul.f32 %v1544, 1.4142135
  %v1547 = vmul.f32 %v1545, 1.4142135
  %s1548 = scalar_lea.vmem %s4, 4
  %v1549 = vld [vmem:[%s1548] ss:$8 sm:$0x3]
  %v1551 = vlaneseq
  %v1552 = vshrl.u32 %v1551, 7
  %v1553 = vsub.s32 0, %v1552
  %v1554 = vrot.slane %v1549, %v1553
  %v1555 = vlaneseq
  %v1556 = vshrl.u32 %v1555, 7
  %v1557 = vsub.s32 1, %v1556
  %v1558 = vrot.slane %v1549, %v1557
  %v1561 = vmul.f32 %v1546, %v1554
  %v1562 = vmul.f32 %v1547, %v1558
  %vm1563 = vcmask 1041408
  %v1564 = vsel %vm1563, %v1561, 0.0
  %v1565 = vsel %vm1563, %v1562, 0.0
  %v1566 = vadd.f32 %v1564, %v1565
  %1567 = vadd.xlane.f32.xlu0 %v1566
  %v1568 = vpop.xlane.xlu0 %1567
  %v1569 = vld [vmem:[%s4 + $0x5] ss:$0 sm:$0xff]
  %v1570 = vadd.f32 %v1568, %v1569
  %vm1571 = vcmask 1024
  %1572 = vst.msk [vmem:[%s5] sm:$0x3] %vm1571, %v1570
  // Predicated region
  $region55: #{simple_disc_forward.1} parent=0 // pred_check
    _
  $region56: #{simple_disc_forward.1} parent=0 // pred_check_branch
    %1574 = sbr.rel (0) target = $region58
  $region57: #{simple_disc_forward.1} parent=0 // pred_region
    _
  $region58: #{simple_disc_forward.1} parent=0 // pred_fallthru
    _
  // Predicated region
  $region59: #{simple_disc_forward.1} parent=0 // pred_check
    _
  $region60: #{simple_disc_forward.1} parent=0 // pred_check_branch
    %1576 = sbr.rel (0) target = $region62
  $region61: #{simple_disc_forward.1} parent=0 // pred_region
    _
  $region62: #{simple_disc_forward.1} parent=0 // pred_fallthru
    _
  %1577 = vsyncmov [#allocation3]
  %s1578 = vpop.sfrf %1577
  %p1579 = scmp.eq.s32.totalorder %s1578, 0
  %p1580 = pneg %p1579
  %1582 = shalt.err (%p1580)

</llo_original>
